<compile_context>
chip_gen: v7x
topology: tpu7x:2x2x1
jax: 0.10.0
libtpu: 0.0.40
codegen_flags: <defaults>
</compile_context>

<pallas_src>
import functools

import jax
import jax.numpy as jnp
from jax import lax
from jax.experimental import pallas as pl
from jax.experimental.pallas import tpu as pltpu


def _conv_bn_silu_kernel(x_ref, w_ref, sb_ref, o_ref, *,
                         kh, kw, stride, tile_h, Wop, C1p, Kc, C2t, fold_kw):
    # x_ref : (halo_h, Wp, C1p)   halo window for this (n, row-tile), bf16
    # w_ref : (kh, kw*C1p, C2t)   folded   -- or (kh*kw, C1p, C2t) unfolded
    # sb_ref: (2, C2t)            folded BN scale / bias (f32)
    # o_ref : (tile_h, Wop, C2t)
    Mt = tile_h * Wop
    acc = jnp.zeros((Mt, C2t), jnp.float32)

    if fold_kw:
        # stride == 1 only.  Width-im2col once per step, then kh fat matmuls
        # with K = kw*C1p (better MXU contraction-dim utilization).
        xcat = jnp.concatenate(
            [x_ref[:, pl.ds(j, Wop), :] for j in range(kw)], axis=-1)
        for i in range(kh):                     # static unrolled row-tap loop
            rows = xcat[i:i + tile_h]           # contiguous major-dim slice
            acc = acc + jnp.dot(rows.reshape(Mt, Kc), w_ref[i],
                                preferred_element_type=jnp.float32)
    else:
        for t in range(kh * kw):                # static unrolled tap loop
            i, j = divmod(t, kw)
            if stride == 1:
                patch = x_ref[pl.ds(i, tile_h), pl.ds(j, Wop), :]
            else:
                patch = x_ref[pl.ds(i, tile_h, stride=stride),
                              pl.ds(j, Wop, stride=stride), :]
            acc = acc + jnp.dot(patch.reshape(Mt, C1p), w_ref[t],
                                preferred_element_type=jnp.float32)

    y = acc * sb_ref[pl.ds(0, 1), :] + sb_ref[pl.ds(1, 1), :]   # BN (eval)
    y = y * jax.nn.sigmoid(y)                                   # SiLU (f32)
    o_ref[...] = y.reshape(tile_h, Wop, C2t).astype(o_ref.dtype)


def conv_bn_silu(x, weight, gamma, beta, running_mean, running_var,
                 *, stride=1, eps=1e-3, tile_m_target=256):
    """Fused Conv2d(bias=False) + BatchNorm2d(eval) + SiLU.  x is NCHW."""
    N, C1, H, W = x.shape
    C2, C1w, kh, kw = weight.shape
    assert C1 == C1w, "groups != 1 not supported"  # TODO(synk): groups/dilation
    ph, pw = kh // 2, kw // 2                      # autopad(k, None, 1)

    Ho = (H + 2 * ph - kh) // stride + 1
    Wo = (W + 2 * pw - kw) // stride + 1

    Wop = ((Wo + 7) // 8) * 8               # sublane-aligned output width
    C1p = ((C1 + 15) // 16) * 16            # bf16 sublane packing quantum
    C2p = ((C2 + 127) // 128) * 128         # lane-dense output channels
    C2t = 256 if (C2p % 256 == 0) else 128  # C_out tile (256 feeds v6e/v7x MXU)
    n_ct = C2p // C2t

    # Spatial row tiling: ~tile_m_target output pixels per grid step, with
    # tile_h*Wop automatically a multiple of 8 (Wop is).
    tile_h = max(1, min(Ho, tile_m_target // max(Wop, 1)))
    n_rt = pl.cdiv(Ho, tile_h)
    Ho_pad = n_rt * tile_h

    halo_h = (tile_h - 1) * stride + kh     # rows one row-tile needs
    Wp = (Wop - 1) * stride + kw            # cols every row-tile needs
    Hp_need = (Ho_pad - 1) * stride + kh    # rows the last window reaches

    fold_kw = (kw > 1) and (stride == 1) and (kw * C1p <= 256)
    Kc = kw * C1p if fold_kw else C1p
    n_taps = kh if fold_kw else kh * kw

    # NCHW -> NHWC bf16, zero pad (top/left = autopad, bottom/right so every
    # window / tap read stays in bounds), channel-pad to C1p.
    x_nhwc = jnp.transpose(x, (0, 2, 3, 1)).astype(jnp.bfloat16)
    x_p = jnp.pad(x_nhwc, ((0, 0),
                           (ph, max(0, Hp_need - H - ph)),
                           (pw, max(0, Wp - W - pw)),
                           (0, C1p - C1)))
    # Restructure into per-row-tile halo windows: (N, n_rt, halo_h, Wp, C1p).
    # Overlap duplication is only (kh - stride)/(tile_h*stride) extra rows.
    row_idx = (jnp.arange(n_rt)[:, None] * (tile_h * stride)
               + jnp.arange(halo_h)[None, :]).reshape(-1)
    x_win = jnp.take(x_p, row_idx, axis=1)
    x_win = x_win.reshape(N, n_rt, halo_h, x_p.shape[2], C1p)[:, :, :, :Wp, :]

    # Weights: (C2, C1, kh, kw) -> per-row-tap (or per-tap) slabs, bf16.
    if fold_kw:
        w_t = jnp.transpose(weight, (2, 3, 1, 0))                # (kh, kw, C1, C2)
        w_t = jnp.pad(w_t, ((0, 0), (0, 0), (0, C1p - C1), (0, C2p - C2)))
        w_t = w_t.reshape(kh, kw * C1p, C2p).astype(jnp.bfloat16)
    else:
        w_t = jnp.transpose(weight, (2, 3, 1, 0)).reshape(kh * kw, C1, C2)
        w_t = jnp.pad(w_t, ((0, 0), (0, C1p - C1),
                            (0, C2p - C2))).astype(jnp.bfloat16)

    # Fold BN (eval) into per-channel scale/bias; single (2, C2p) f32 operand.
    scale = (gamma / jnp.sqrt(running_var + eps)).astype(jnp.float32)
    bias = (beta - running_mean * scale).astype(jnp.float32)
    sb = jnp.pad(jnp.stack([scale, bias]), ((0, 0), (0, C2p - C2)))

    kernel = functools.partial(_conv_bn_silu_kernel, kh=kh, kw=kw,
                               stride=stride, tile_h=tile_h, Wop=Wop,
                               C1p=C1p, Kc=Kc, C2t=C2t, fold_kw=fold_kw)

    # VMEM budget: double-buffered blocks + in-kernel temporaries + headroom,
    # clamped to 75% of the device's physical VMEM.
    Mt = tile_h * Wop
    block_bytes = 2 * (halo_h * Wp * C1p * 2          # input halo window
                       + n_taps * Kc * C2t * 2        # weight tile
                       + 2 * C2t * 4                  # scale/bias
                       + Mt * C2t * 2)                # output tile
    scratch_bytes = (Mt * C2t * 4                     # f32 accumulator
                     + (kw if fold_kw else 1) * halo_h * Wop * C1p * 2  # xcat
                     + Mt * Kc * 2)                   # patch operand
    try:
        vmem_cap = pltpu.get_tpu_info().vmem_capacity_bytes
    except Exception:
        vmem_cap = 64 * 1024 * 1024
    vmem_limit = int(min(max(block_bytes + scratch_bytes + (8 << 20), 16 << 20),
                         vmem_cap * 3 // 4))

    out = pl.pallas_call(
        kernel,
        out_shape=jax.ShapeDtypeStruct((N, Ho_pad, Wop, C2p), jnp.bfloat16),
        grid_spec=pltpu.PrefetchScalarGridSpec(
            num_scalar_prefetch=0,
            # C_out tile outermost so weight tiles stream exactly once.
            grid=(n_ct, N, n_rt),
            in_specs=[
                pl.BlockSpec((None, None, halo_h, Wp, C1p),
                             lambda c, n, r: (n, r, 0, 0, 0)),
                pl.BlockSpec((n_taps, Kc, C2t), lambda c, n, r: (0, 0, c)),
                pl.BlockSpec((2, C2t), lambda c, n, r: (0, c)),
            ],
            out_specs=pl.BlockSpec((None, tile_h, Wop, C2t),
                                   lambda c, n, r: (n, r, 0, c)),
        ),
        compiler_params=pltpu.CompilerParams(
            dimension_semantics=("parallel", "parallel", "parallel"),
            vmem_limit_bytes=vmem_limit),
    )(x_win, w_t, sb)

    out = out[:, :Ho, :Wo, :C2]
    # NHWC -> NCHW only to match the PyTorch module interface.
    return jnp.transpose(out, (0, 3, 1, 2)).astype(x.dtype)


def _reference(x, weight, gamma, beta, rmean, rvar, *, stride=1, eps=1e-3):
    # Same bf16 input/weight quantization, f32 accumulation and bf16 writeback
    # as the kernel, so the comparison isolates kernel logic.
    kh, kw = weight.shape[2], weight.shape[3]
    ph, pw = kh // 2, kw // 2
    y = lax.conv_general_dilated(
        x.astype(jnp.bfloat16), weight.astype(jnp.bfloat16),
        window_strides=(stride, stride),
        padding=[(ph, ph), (pw, pw)],
        dimension_numbers=("NCHW", "OIHW", "NCHW"),
        preferred_element_type=jnp.float32)
    scale = (gamma / jnp.sqrt(rvar + eps)).reshape(1, -1, 1, 1)
    bias = (beta - rmean * gamma / jnp.sqrt(rvar + eps)).reshape(1, -1, 1, 1)
    y = y * scale + bias
    y = y * jax.nn.sigmoid(y)
    return y.astype(jnp.bfloat16).astype(x.dtype)


if __name__ == "__main__":
    root = jax.random.PRNGKey(0)

    def make_case(key, N, C1, C2, k):
        ks = jax.random.split(key, 6)
        x = jax.random.normal(ks[0], (N, C1, Hc, Wc), dtype=jnp.float32)
        w = jax.random.normal(ks[1], (C2, C1, k, k), dtype=jnp.float32) * 0.1
        gamma = jax.random.normal(ks[2], (C2,), jnp.float32) * 0.1 + 1.0
        beta = jax.random.normal(ks[3], (C2,), jnp.float32) * 0.1
        rmean = jax.random.normal(ks[4], (C2,), jnp.float32) * 0.1
        rvar = jax.random.uniform(ks[5], (C2,), jnp.float32,
                                  minval=0.5, maxval=1.5)
        return x, w, gamma, beta, rmean, rvar

    # (N, C1, C2, k, s, H, W) — Conv(c1, c2, k, s) with autopad, like the module.
    cases = [
        (2, 4, 8, 3, 1, 16, 16),    # main case: folded-kw MXU path (small C_in)
        (1, 8, 16, 1, 1, 16, 16),   # 1x1 pointwise conv
        (1, 4, 8, 3, 2, 16, 16),    # stride-2 downsample (strided tap path)
        (1, 96, 16, 3, 1, 8, 8),    # per-tap path (kw*C1p > 256)
    ]
    keys = jax.random.split(root, len(cases))
    for (N, C1, C2, k, s, Hc, Wc), ck in zip(cases, keys):
        args = make_case(ck, N, C1, C2, k)
        y = jax.block_until_ready(conv_bn_silu(*args, stride=s))
        y_ref = _reference(*args, stride=s)
        Ho = (Hc + 2 * (k // 2) - k) // s + 1
        Wo = (Wc + 2 * (k // 2) - k) // s + 1
        assert y.shape == (N, C2, Ho, Wo), ((N, C1, C2, k, s), y.shape)
        max_err = float(jnp.max(jnp.abs(y - y_ref)))
        assert jnp.allclose(y, y_ref, atol=1e-2, rtol=2e-2), \
            ((N, C1, C2, k, s), max_err)

    print("KERNEL_OK")
</pallas_src>

<mosaic_0001>
module attributes {stable_mosaic.version = 11 : i64} {
  func.func @_conv_bn_silu_kernel(%arg0: i32, %arg1: i32, %arg2: i32, %arg3: memref<1x1x18x18x16xbf16, #tpu.memory_space<vmem>>, %arg4: memref<3x48x128xbf16, #tpu.memory_space<vmem>>, %arg5: memref<2x128xf32, #tpu.memory_space<vmem>>, %arg6: memref<1x16x16x128xbf16, #tpu.memory_space<vmem>>) attributes {dimension_semantics = [#tpu.dimension_semantics<parallel>, #tpu.dimension_semantics<parallel>, #tpu.dimension_semantics<parallel>], iteration_bounds = array<i64: 1, 2, 1>, scalar_prefetch = 0 : i64, scratch_operands = 0 : i64, tpu.core_type = #tpu.core_type<tc>, window_params = [{transform_indices = @transform_0, window_bounds = array<i64: 1, 1, 18, 18, 16>}, {transform_indices = @transform_1, window_bounds = array<i64: 3, 48, 128>}, {transform_indices = @transform_2, window_bounds = array<i64: 2, 128>}, {transform_indices = @transform_3, window_bounds = array<i64: 1, 16, 16, 128>}]} {
    %cst = arith.constant 0.000000e+00 : f32
    %0 = vector.broadcast %cst : f32 to vector<256x128xf32>
    %c0 = arith.constant 0 : index
    %c0_0 = arith.constant 0 : index
    %c0_1 = arith.constant 0 : index
    %c0_2 = arith.constant 0 : index
    %c0_3 = arith.constant 0 : index
    %1 = vector.load %arg3[%c0, %c0_0, %c0_1, %c0_2, %c0_3] : memref<1x1x18x18x16xbf16, #tpu.memory_space<vmem>>, vector<1x1x18x16x16xbf16>
    %2 = vector.shape_cast %1 : vector<1x1x18x16x16xbf16> to vector<18x16x16xbf16>
    %c0_4 = arith.constant 0 : index
    %c0_5 = arith.constant 0 : index
    %c0_6 = arith.constant 0 : index
    %c1 = arith.constant 1 : index
    %c0_7 = arith.constant 0 : index
    %3 = vector.load %arg3[%c0_4, %c0_5, %c0_6, %c1, %c0_7] : memref<1x1x18x18x16xbf16, #tpu.memory_space<vmem>>, vector<1x1x18x16x16xbf16>
    %4 = vector.shape_cast %3 : vector<1x1x18x16x16xbf16> to vector<18x16x16xbf16>
    %c0_8 = arith.constant 0 : index
    %c0_9 = arith.constant 0 : index
    %c0_10 = arith.constant 0 : index
    %c2 = arith.constant 2 : index
    %c0_11 = arith.constant 0 : index
    %5 = vector.load %arg3[%c0_8, %c0_9, %c0_10, %c2, %c0_11] : memref<1x1x18x18x16xbf16, #tpu.memory_space<vmem>>, vector<1x1x18x16x16xbf16>
    %6 = vector.shape_cast %5 : vector<1x1x18x16x16xbf16> to vector<18x16x16xbf16>
    %7 = tpu.concatenate %2, %4, %6 in 2 : vector<18x16x16xbf16>, vector<18x16x16xbf16>, vector<18x16x16xbf16> -> vector<18x16x48xbf16>
    %8 = vector.extract_strided_slice %7 {offsets = [0, 0, 0], sizes = [16, 16, 48], strides = [1, 1, 1]} : vector<18x16x48xbf16> to vector<16x16x48xbf16>
    %9 = vector.shape_cast %8 : vector<16x16x48xbf16> to vector<256x48xbf16>
    %c0_12 = arith.constant 0 : index
    %c0_13 = arith.constant 0 : index
    %c0_14 = arith.constant 0 : index
    %10 = vector.load %arg4[%c0_12, %c0_13, %c0_14] : memref<3x48x128xbf16, #tpu.memory_space<vmem>>, vector<1x48x128xbf16>
    %11 = vector.shape_cast %10 : vector<1x48x128xbf16> to vector<48x128xbf16>
    %cst_15 = arith.constant dense<0.000000e+00> : vector<256x128xf32>
    %12 = tpu.matmul %9, %11, %cst_15 {dimension_numbers = #tpu.dot_dimension_numbers<[1], [0], [0], [1], [0, 0, 1, 1], [], []>} : vector<256x48xbf16>, vector<48x128xbf16>, vector<256x128xf32> -> vector<256x128xf32>
    %13 = arith.addf %0, %12 : vector<256x128xf32>
    %14 = vector.extract_strided_slice %7 {offsets = [1, 0, 0], sizes = [16, 16, 48], strides = [1, 1, 1]} : vector<18x16x48xbf16> to vector<16x16x48xbf16>
    %15 = vector.shape_cast %14 : vector<16x16x48xbf16> to vector<256x48xbf16>
    %c1_16 = arith.constant 1 : index
    %c0_17 = arith.constant 0 : index
    %c0_18 = arith.constant 0 : index
    %16 = vector.load %arg4[%c1_16, %c0_17, %c0_18] : memref<3x48x128xbf16, #tpu.memory_space<vmem>>, vector<1x48x128xbf16>
    %17 = vector.shape_cast %16 : vector<1x48x128xbf16> to vector<48x128xbf16>
    %cst_19 = arith.constant dense<0.000000e+00> : vector<256x128xf32>
    %18 = tpu.matmul %15, %17, %cst_19 {dimension_numbers = #tpu.dot_dimension_numbers<[1], [0], [0], [1], [0, 0, 1, 1], [], []>} : vector<256x48xbf16>, vector<48x128xbf16>, vector<256x128xf32> -> vector<256x128xf32>
    %19 = arith.addf %13, %18 : vector<256x128xf32>
    %20 = vector.extract_strided_slice %7 {offsets = [2, 0, 0], sizes = [16, 16, 48], strides = [1, 1, 1]} : vector<18x16x48xbf16> to vector<16x16x48xbf16>
    %21 = vector.shape_cast %20 : vector<16x16x48xbf16> to vector<256x48xbf16>
    %c2_20 = arith.constant 2 : index
    %c0_21 = arith.constant 0 : index
    %c0_22 = arith.constant 0 : index
    %22 = vector.load %arg4[%c2_20, %c0_21, %c0_22] : memref<3x48x128xbf16, #tpu.memory_space<vmem>>, vector<1x48x128xbf16>
    %23 = vector.shape_cast %22 : vector<1x48x128xbf16> to vector<48x128xbf16>
    %cst_23 = arith.constant dense<0.000000e+00> : vector<256x128xf32>
    %24 = tpu.matmul %21, %23, %cst_23 {dimension_numbers = #tpu.dot_dimension_numbers<[1], [0], [0], [1], [0, 0, 1, 1], [], []>} : vector<256x48xbf16>, vector<48x128xbf16>, vector<256x128xf32> -> vector<256x128xf32>
    %25 = arith.addf %19, %24 : vector<256x128xf32>
    %c0_24 = arith.constant 0 : index
    %c0_25 = arith.constant 0 : index
    %26 = vector.load %arg5[%c0_24, %c0_25] : memref<2x128xf32, #tpu.memory_space<vmem>>, vector<1x128xf32>
    %27 = vector.broadcast %26 : vector<1x128xf32> to vector<256x128xf32>
    %28 = arith.mulf %25, %27 : vector<256x128xf32>
    %c1_26 = arith.constant 1 : index
    %c0_27 = arith.constant 0 : index
    %29 = vector.load %arg5[%c1_26, %c0_27] : memref<2x128xf32, #tpu.memory_space<vmem>>, vector<1x128xf32>
    %30 = vector.broadcast %29 : vector<1x128xf32> to vector<256x128xf32>
    %31 = arith.addf %28, %30 : vector<256x128xf32>
    %32 = arith.negf %31 : vector<256x128xf32>
    %33 = math.exp %32 : vector<256x128xf32>
    %cst_28 = arith.constant 1.000000e+00 : f32
    %34 = vector.broadcast %cst_28 : f32 to vector<256x128xf32>
    %35 = arith.addf %34, %33 : vector<256x128xf32>
    %36 = arith.divf %34, %35 : vector<256x128xf32>
    %37 = arith.mulf %31, %36 : vector<256x128xf32>
    %38 = vector.shape_cast %37 : vector<256x128xf32> to vector<16x16x128xf32>
    %39 = arith.truncf %38 : vector<16x16x128xf32> to vector<16x16x128xbf16>
    %c0_29 = arith.constant 0 : index
    %c0_30 = arith.constant 0 : index
    %c0_31 = arith.constant 0 : index
    %c0_32 = arith.constant 0 : index
    %40 = vector.load %arg6[%c0_29, %c0_30, %c0_31, %c0_32] : memref<1x16x16x128xbf16, #tpu.memory_space<vmem>>, vector<1x16x16x128xbf16>
    %41 = vector.shape_cast %40 : vector<1x16x16x128xbf16> to vector<16x16x128xbf16>
    %42 = vector.shape_cast %39 : vector<16x16x128xbf16> to vector<1x16x16x128xbf16>
    tpu.vector_store %arg6[%c0_29, %c0_30, %c0_31, %c0_32], %42 {strides = array<i32>} : memref<1x16x16x128xbf16, #tpu.memory_space<vmem>>, vector<1x16x16x128xbf16>,
    return
  }
  func.func @transform_0(%arg0: i32, %arg1: i32, %arg2: i32) -> (i32, i32, i32, i32, i32) {
    %c0_i32 = arith.constant 0 : i32
    %c0_i32_0 = arith.constant 0 : i32
    %c0_i32_1 = arith.constant 0 : i32
    %c0_i32_2 = arith.constant 0 : i32
    return %arg1, %arg2, %c0_i32, %c0_i32_0, %c0_i32_1 : i32, i32, i32, i32, i32
  }
  func.func @transform_1(%arg0: i32, %arg1: i32, %arg2: i32) -> (i32, i32, i32) {
    %c0_i32 = arith.constant 0 : i32
    %c0_i32_0 = arith.constant 0 : i32
    %c0_i32_1 = arith.constant 0 : i32
    return %c0_i32, %c0_i32_0, %arg0 : i32, i32, i32
  }
  func.func @transform_2(%arg0: i32, %arg1: i32, %arg2: i32) -> (i32, i32) {
    %c0_i32 = arith.constant 0 : i32
    %c0_i32_0 = arith.constant 0 : i32
    return %c0_i32, %arg0 : i32, i32
  }
  func.func @transform_3(%arg0: i32, %arg1: i32, %arg2: i32) -> (i32, i32, i32, i32) {
    %c0_i32 = arith.constant 0 : i32
    %c0_i32_0 = arith.constant 0 : i32
    return %arg1, %arg2, %c0_i32, %arg0 : i32, i32, i32, i32
  }
}

</mosaic_0001>

<llo_original>
// kernel: tpu_custom_call.1
$region0: #{tpu_custom_call.1}
  #allocation0 [shape = 'u32[]', space=smem, size = 0x4, offset = 0x4, fixed_abs, tag = 'smem constant byte address 0x4 - core index']
  #allocation1 [shape = 'u32[144,128]{1,0:T(1,128)}', space=vmem, size = 0x12000, scoped, tag = 'internal scratch']
  %s0 = inlined_call_operand.vmem [shape: bf16[2,1,18,18,16], index: 0, kind: input, shape index: {}]
  %s1 = inlined_call_operand.vmem [shape: bf16[3,48,128], index: 1, kind: input, shape index: {}]
  %s2 = inlined_call_operand.vmem [shape: f32[2,128], index: 2, kind: input, shape index: {}]
  %s3 = inlined_call_operand.hbm [shape: bf16[2,16,16,128], index: 3, kind: output, shape index: {}]
  %s4 = sld [smem:[#allocation0]]
  $region45: #{tpu_custom_call.1} parent=0
    _
  %s6 = ssub.s32 1, %s4
  %s7 = scalar_select 0, %s6, %s4
  $region1: #{tpu_custom_call.1} parent=0
    #allocation2 [shape = 'u8[131072]{0}', space=vmem, size = 0x20000, scoped, tag = 'output window, operand 0']
    #allocation3 [shape = 's32[2]{0}', space=sflag, size = 0x8, scoped, tag = 'scoped memory for tpu_custom_call.1']
    %8 = vsyncpa [#allocation3], 0
    %s9 = scalar_lea.sflag [#allocation3], 1
    %10 = vsyncpa %s9, 0
    loop: start=0, step=1, limit=4
    $region2: #{tpu_custom_call.1} parent=1 // loop_pre_header
      _
    $region3: #{tpu_custom_call.1} parent=1 // loop_header
      %s12 = sphi 0, %s16
      %p13 = scmp.ge.s32.totalorder %s12, 4
      %s19 = sphi 0, %s38
      %s20 = sphi 0, %s34
      %s21 = sphi 0, %s30
      %s22 = sphi 0, %s19
      %s23 = sphi 0, %s20
      %s24 = sphi 0, %s21
      %s25 = sphi 0, %s22
      %s26 = sphi 0, %s23
      %s27 = sphi 0, %s24
      %s43 = sphi 0, %s45
      %s46 = sphi 0, %s43
      %s47 = sphi 0, %s46
      %s63 = sphi 0, %s47
      %s69 = sphi 0, %s71
      %s72 = sphi 0, %s69
      %s73 = sphi 0, %s72
      %s89 = sphi 0, %s73
      %s95 = sphi 0, %s97
      %s98 = sphi 0, %s95
      %s99 = sphi 0, %s98
      %s115 = sphi 0, %s99
      %s125 = sphi 0, %s127
      %s128 = sphi 0, %s125
      %s129 = sphi 0, %s128
      %s145 = sphi 0, %s129
    $region4: #{tpu_custom_call.1} parent=1 // loop_header_branch
      %15 = sbr.rel (%p13) target = $region8
    $region5: #{tpu_custom_call.1} parent=1 // loop_body
      %s17 = ssub.s32 %s12, 1
      %s18 = ssub.s32 %s12, 2
      %s28 = sadd.s32 1, %s21
      %p29 = scmp.ge.s32.totalorder %s28, 1
      %s30 = scalar_select %p29, 0, %s28
      %s31 = sadd.s32 1, %s20
      %s32 = scalar_select %p29, %s31, %s20
      %p33 = scmp.ge.s32.totalorder %s32, 2
      %s34 = scalar_select %p33, 0, %s32
      %s35 = sadd.s32 1, %s19
      %s36 = scalar_select %p33, %s35, %s19
      %p37 = scmp.ge.s32.totalorder %s36, 1
      %s38 = scalar_select %p37, 0, %s36
      %s39 = ssub.s32 %s20, %s34
      %s40 = ssub.s32 %s21, %s30
      %s41 = sor.u32 %s39, %s40
      %p42 = scmp.eq.s32.totalorder %s41, 0
      %s44 = sadd.s32 %s43, 1
      %s45 = scalar_select %p42, %s43, %s44
      %p48 = pneg %p42
      %p49 = scmp.eq.s32.totalorder %s12, 1
      %p50 = por %p48, %p49
      %p51 = scmp.ne.s32.totalorder %s43, %s46
      %p52 = scmp.eq.s32.totalorder %s12, 0
      %p53 = por %p51, %p52
      %p54 = scmp.ne.s32.totalorder %s43, %s46
      %p55 = scmp.eq.s32.totalorder %s17, 1
      %p56 = por %p54, %p55
      %p57 = scmp.ne.s32.totalorder %s46, %s47
      %p58 = scmp.eq.s32.totalorder %s17, 0
      %p59 = por %p57, %p58
      %p60 = scmp.ne.s32.totalorder %s46, %s47
      %p61 = scmp.eq.s32.totalorder %s18, 1
      %p62 = por %p60, %p61
      %p64 = scmp.ne.s32.totalorder %s47, %s63
      %p65 = scmp.eq.s32.totalorder %s18, 0
      %p66 = por %p64, %p65
      %s67 = ssub.s32 %s19, %s38
      %p68 = scmp.eq.s32.totalorder %s67, 0
      %s70 = sadd.s32 %s69, 1
      %s71 = scalar_select %p68, %s69, %s70
      %p74 = pneg %p68
      %p75 = scmp.eq.s32.totalorder %s12, 1
      %p76 = por %p74, %p75
      %p77 = scmp.ne.s32.totalorder %s69, %s72
      %p78 = scmp.eq.s32.totalorder %s12, 0
      %p79 = por %p77, %p78
      %p80 = scmp.ne.s32.totalorder %s69, %s72
      %p81 = scmp.eq.s32.totalorder %s17, 1
      %p82 = por %p80, %p81
      %p83 = scmp.ne.s32.totalorder %s72, %s73
      %p84 = scmp.eq.s32.totalorder %s17, 0
      %p85 = por %p83, %p84
      %p86 = scmp.ne.s32.totalorder %s72, %s73
      %p87 = scmp.eq.s32.totalorder %s18, 1
      %p88 = por %p86, %p87
      %p90 = scmp.ne.s32.totalorder %s73, %s89
      %p91 = scmp.eq.s32.totalorder %s18, 0
      %p92 = por %p90, %p91
      %s93 = ssub.s32 %s19, %s38
      %p94 = scmp.eq.s32.totalorder %s93, 0
      %s96 = sadd.s32 %s95, 1
      %s97 = scalar_select %p94, %s95, %s96
      %p100 = pneg %p94
      %p101 = scmp.eq.s32.totalorder %s12, 1
      %p102 = por %p100, %p101
      %p103 = scmp.ne.s32.totalorder %s95, %s98
      %p104 = scmp.eq.s32.totalorder %s12, 0
      %p105 = por %p103, %p104
      %p106 = scmp.ne.s32.totalorder %s95, %s98
      %p107 = scmp.eq.s32.totalorder %s17, 1
      %p108 = por %p106, %p107
      %p109 = scmp.ne.s32.totalorder %s98, %s99
      %p110 = scmp.eq.s32.totalorder %s17, 0
      %p111 = por %p109, %p110
      %p112 = scmp.ne.s32.totalorder %s98, %s99
      %p113 = scmp.eq.s32.totalorder %s18, 1
      %p114 = por %p112, %p113
      %p116 = scmp.ne.s32.totalorder %s99, %s115
      %p117 = scmp.eq.s32.totalorder %s18, 0
      %p118 = por %p116, %p117
      %s119 = ssub.s32 %s20, %s34
      %s120 = ssub.s32 %s21, %s30
      %s121 = sor.u32 %s119, %s120
      %s122 = ssub.s32 %s19, %s38
      %s123 = sor.u32 %s121, %s122
      %p124 = scmp.eq.s32.totalorder %s123, 0
      %s126 = sadd.s32 %s125, 1
      %s127 = scalar_select %p124, %s125, %s126
      %p130 = pneg %p124
      %p131 = scmp.eq.s32.totalorder %s12, 1
      %p132 = por %p130, %p131
      %p133 = scmp.ne.s32.totalorder %s125, %s128
      %p134 = scmp.eq.s32.totalorder %s12, 0
      %p135 = por %p133, %p134
      %p136 = scmp.ne.s32.totalorder %s125, %s128
      %p137 = scmp.eq.s32.totalorder %s17, 1
      %p138 = por %p136, %p137
      %p139 = scmp.ne.s32.totalorder %s128, %s129
      %p140 = scmp.eq.s32.totalorder %s17, 0
      %p141 = por %p139, %p140
      %p142 = scmp.ne.s32.totalorder %s128, %s129
      %p143 = scmp.eq.s32.totalorder %s18, 1
      %p144 = por %p142, %p143
      %p146 = scmp.ne.s32.totalorder %s129, %s145
      %p147 = scmp.eq.s32.totalorder %s18, 0
      %p148 = por %p146, %p147
      %p149 = scmp.le.s32.totalorder 1, %s12
      %p150 = scmp.lt.s32.totalorder %s12, 3
      %p151 = pnand %p149, %p150
      %p152 = pneg %p151
      // Predicated region
      $region9: #{tpu_custom_call.1} parent=5 // pred_check
        _
      $region10: #{tpu_custom_call.1} parent=5 // pred_check_branch
        %154 = sbr.rel (%p151) target = $region12
      $region11: #{tpu_custom_call.1} parent=5 // pred_region
        %s155 = ssub.s32 %s12, 1
        // Predicated region
        $region13: #{tpu_custom_call.1} parent=11 // pred_check
          %p156 = pneg %p85
        $region14: #{tpu_custom_call.1} parent=11 // pred_check_branch
          %158 = sbr.rel (%p156) target = $region16
        $region15: #{tpu_custom_call.1} parent=11 // pred_region
          %p159 = scmp.lt.s32.totalorder %s22, 0
          %s160 = scalar_select %p159, %s22, 0
          %s161 = smul.addr %s160, 4
          %s162 = scalar_lea.vmem %s1, %s161
        $region16: #{tpu_custom_call.1} parent=11 // pred_fallthru
          _
        // Predicated region
        $region17: #{tpu_custom_call.1} parent=11 // pred_check
          %p163 = pneg %p111
        $region18: #{tpu_custom_call.1} parent=11 // pred_check_branch
          %165 = sbr.rel (%p163) target = $region20
        $region19: #{tpu_custom_call.1} parent=11 // pred_region
          %p166 = scmp.lt.s32.totalorder %s22, 0
          %s167 = scalar_select %p166, %s22, 0
          %s168 = smul.addr %s167, 2
          %s169 = scalar_lea.vmem %s2, %s168
        $region20: #{tpu_custom_call.1} parent=11 // pred_fallthru
          _
      $region12: #{tpu_custom_call.1} parent=5 // pred_fallthru
        _
      %p170 = scmp.lt.s32.totalorder %s12, 2
      // Predicated region
      $region21: #{tpu_custom_call.1} parent=5 // pred_check
        %p171 = pneg %p170
      $region22: #{tpu_custom_call.1} parent=5 // pred_check_branch
        %173 = sbr.rel (%p171) target = $region24
      $region23: #{tpu_custom_call.1} parent=5 // pred_region
        // Predicated region
        $region25: #{tpu_custom_call.1} parent=23 // pred_check
          %p174 = pneg %p53
        $region26: #{tpu_custom_call.1} parent=23 // pred_check_branch
          %176 = sbr.rel (%p174) target = $region28
        $region27: #{tpu_custom_call.1} parent=23 // pred_region
          %p177 = scmp.lt.s32.totalorder %s20, 1
          %s178 = scalar_select %p177, %s20, 1
          %p179 = scmp.lt.s32.totalorder %s21, 0
          %s180 = scalar_select %p179, %s21, 0
          %s181 = smul.addr %s180, 54
          %s182 = smul.addr %s178, 54
          %s183 = sadd.s32 %s181, %s182
          %s184 = smul.addr %s183, 4
          %s185 = scalar_lea.vmem %s0, %s184
        $region28: #{tpu_custom_call.1} parent=23 // pred_fallthru
          _
      $region24: #{tpu_custom_call.1} parent=5 // pred_fallthru
        _
      %p186 = scmp.le.s32.totalorder 1, %s12
      %p187 = scmp.lt.s32.totalorder %s12, 3
      %p188 = pnand %p186, %p187
      %p189 = pneg %p188
      // Predicated region
      $region29: #{tpu_custom_call.1} parent=5 // pred_check
        _
      $region30: #{tpu_custom_call.1} parent=5 // pred_check_branch
        %191 = sbr.rel (%p188) target = $region32
      $region31: #{tpu_custom_call.1} parent=5 // pred_region
        %s192 = ssub.s32 %s12, 1
        %p193 = scmp.lt.s32.totalorder %s23, 1
        %s194 = scalar_select %p193, %s23, 1
        %p195 = scmp.lt.s32.totalorder %s24, 0
        %s196 = scalar_select %p195, %s24, 0
        %s197 = smul.addr %s196, 54
        %s198 = smul.addr %s194, 54
        %s199 = sadd.s32 %s197, %s198
        %s200 = smul.addr %s199, 4
        %s201 = scalar_lea.vmem %s0, %s200
        %p202 = pneg %p59
        %p203 = pneg %p56
        %p204 = scmp.lt.s32.totalorder %s22, 0
        %s205 = scalar_select %p204, %s22, 0
        %s206 = smul.addr %s205, 4
        %s207 = scalar_lea.vmem %s1, %s206
        %p208 = pneg %p85
        %p209 = pneg %p82
        %p210 = scmp.lt.s32.totalorder %s22, 0
        %s211 = scalar_select %p210, %s22, 0
        %s212 = smul.addr %s211, 2
        %s213 = scalar_lea.vmem %s2, %s212
        %p214 = pneg %p111
        %p215 = pneg %p108
        %p216 = pneg %p141
        %p217 = pneg %p138
        %s218 = sand.u32 %s128, 1
        %s219 = scalar_lea.sflag [#allocation3], %s218
        %s220 = sand.u32 %s128, 1
        %s221 = smul.addr %s220, 128
        %s222 = scalar_lea.vmem [#allocation2], %s221
        %p223 = scmp.lt.s32.totalorder %s23, 1
        %s224 = scalar_select %p223, %s23, 1
        %p225 = scmp.lt.s32.totalorder %s24, 0
        %s226 = scalar_select %p225, %s24, 0
        %s227 = smul.addr %s226, 54
        %s228 = smul.addr %s224, 54
        %s229 = sadd.s32 %s227, %s228
        %s230 = smul.addr %s229, 4
        %s231 = scalar_lea.vmem %s0, %s230
        %p232 = scmp.lt.s32.totalorder %s22, 0
        %s233 = scalar_select %p232, %s22, 0
        %s234 = smul.addr %s233, 4
        %s235 = scalar_lea.vmem %s1, %s234
        %p236 = scmp.lt.s32.totalorder %s22, 0
        %s237 = scalar_select %p236, %s22, 0
        %s238 = smul.addr %s237, 2
        %s239 = scalar_lea.vmem %s2, %s238
        %s240 = smul.u32 16, %s24
        %v242 = vld [vmem:[%s231] sm:$0xf]
        %v243 = vld [vmem:[%s231 + $0x4] sm:$0xf]
        %v244 = vld [vmem:[%s231 + $0xc] sm:$0xf]
        %v245 = vld [vmem:[%s231 + $0x10] sm:$0xf]
        %v246 = vld [vmem:[%s231 + $0x18] sm:$0xf]
        %v247 = vld [vmem:[%s231 + $0x1c] sm:$0xf]
        %v248 = vld [vmem:[%s231 + $0x24] sm:$0xf]
        %v249 = vld [vmem:[%s231 + $0x28] sm:$0xf]
        %v250 = vld [vmem:[%s231 + $0x30] sm:$0xf]
        %v251 = vld [vmem:[%s231 + $0x34] sm:$0xf]
        %v252 = vld [vmem:[%s231 + $0x3c] sm:$0xf]
        %v253 = vld [vmem:[%s231 + $0x40] sm:$0xf]
        %v254 = vld [vmem:[%s231 + $0x48] sm:$0xf]
        %v255 = vld [vmem:[%s231 + $0x4c] sm:$0xf]
        %v256 = vld [vmem:[%s231 + $0x54] sm:$0xf]
        %v257 = vld [vmem:[%s231 + $0x58] sm:$0xf]
        %v258 = vld [vmem:[%s231 + $0x60] sm:$0xf]
        %v259 = vld [vmem:[%s231 + $0x64] sm:$0xf]
        %v260 = vld [vmem:[%s231 + $0x6c] sm:$0xf]
        %v261 = vld [vmem:[%s231 + $0x70] sm:$0xf]
        %v262 = vld [vmem:[%s231 + $0x78] sm:$0xf]
        %v263 = vld [vmem:[%s231 + $0x7c] sm:$0xf]
        %v264 = vld [vmem:[%s231 + $0x84] sm:$0xf]
        %v265 = vld [vmem:[%s231 + $0x88] sm:$0xf]
        %v266 = vld [vmem:[%s231 + $0x90] sm:$0xf]
        %v267 = vld [vmem:[%s231 + $0x94] sm:$0xf]
        %v268 = vld [vmem:[%s231 + $0x9c] sm:$0xf]
        %v269 = vld [vmem:[%s231 + $0xa0] sm:$0xf]
        %v270 = vld [vmem:[%s231 + $0xa8] sm:$0xf]
        %v271 = vld [vmem:[%s231 + $0xac] sm:$0xf]
        %v272 = vld [vmem:[%s231 + $0xb4] sm:$0xf]
        %v273 = vld [vmem:[%s231 + $0xb8] sm:$0xf]
        %v274 = vld [vmem:[%s231 + $0xc0] sm:$0xf]
        %v275 = vld [vmem:[%s231 + $0xc4] sm:$0xf]
        %v276 = vld [vmem:[%s231 + $0xcc] sm:$0xf]
        %v277 = vld [vmem:[%s231 + $0xd0] sm:$0xf]
        %v278 = vld [vmem:[%s231 + $0x8] sm:$0x1]
        %v279 = vld [vmem:[%s231 + $0x14] sm:$0x1]
        %v280 = vld [vmem:[%s231 + $0x20] sm:$0x1]
        %v281 = vld [vmem:[%s231 + $0x2c] sm:$0x1]
        %v282 = vld [vmem:[%s231 + $0x38] sm:$0x1]
        %v283 = vld [vmem:[%s231 + $0x44] sm:$0x1]
        %v284 = vld [vmem:[%s231 + $0x50] sm:$0x1]
        %v285 = vld [vmem:[%s231 + $0x5c] sm:$0x1]
        %v286 = vld [vmem:[%s231 + $0x68] sm:$0x1]
        %v287 = vld [vmem:[%s231 + $0x74] sm:$0x1]
        %v288 = vld [vmem:[%s231 + $0x80] sm:$0x1]
        %v289 = vld [vmem:[%s231 + $0x8c] sm:$0x1]
        %v290 = vld [vmem:[%s231 + $0x98] sm:$0x1]
        %v291 = vld [vmem:[%s231 + $0xa4] sm:$0x1]
        %v292 = vld [vmem:[%s231 + $0xb0] sm:$0x1]
        %v293 = vld [vmem:[%s231 + $0xbc] sm:$0x1]
        %v294 = vld [vmem:[%s231 + $0xc8] sm:$0x1]
        %v295 = vld [vmem:[%s231 + $0xd4] sm:$0x1]
        %v296 = vld [vmem:[%s231] sm:$0xe]
        %v297 = vld [vmem:[%s231 + $0xc] sm:$0xe]
        %v298 = vld [vmem:[%s231 + $0x18] sm:$0xe]
        %v299 = vld [vmem:[%s231 + $0x24] sm:$0xe]
        %v300 = vld [vmem:[%s231 + $0x30] sm:$0xe]
        %v301 = vld [vmem:[%s231 + $0x3c] sm:$0xe]
        %v302 = vld [vmem:[%s231 + $0x48] sm:$0xe]
        %v303 = vld [vmem:[%s231 + $0x54] sm:$0xe]
        %v304 = vld [vmem:[%s231 + $0x60] sm:$0xe]
        %v305 = vld [vmem:[%s231 + $0x6c] sm:$0xe]
        %v306 = vld [vmem:[%s231 + $0x78] sm:$0xe]
        %v307 = vld [vmem:[%s231 + $0x84] sm:$0xe]
        %v308 = vld [vmem:[%s231 + $0x90] sm:$0xe]
        %v309 = vld [vmem:[%s231 + $0x9c] sm:$0xe]
        %v310 = vld [vmem:[%s231 + $0xa8] sm:$0xe]
        %v311 = vld [vmem:[%s231 + $0xb4] sm:$0xe]
        %v312 = vld [vmem:[%s231 + $0xc0] sm:$0xe]
        %v313 = vld [vmem:[%s231 + $0xcc] sm:$0xe]
        %v350 = vunpack.c.l.b16 %v242
        %v351 = vunpack.c.l.b16 %v243
        %v352 = vunpack.c.l.b16 %v244
        %v353 = vunpack.c.l.b16 %v245
        %v354 = vunpack.c.l.b16 %v246
        %v355 = vunpack.c.l.b16 %v247
        %v356 = vunpack.c.l.b16 %v248
        %v357 = vunpack.c.l.b16 %v249
        %v358 = vunpack.c.l.b16 %v250
        %v359 = vunpack.c.l.b16 %v251
        %v360 = vunpack.c.l.b16 %v252
        %v361 = vunpack.c.l.b16 %v253
        %v362 = vunpack.c.l.b16 %v254
        %v363 = vunpack.c.l.b16 %v255
        %v364 = vunpack.c.l.b16 %v256
        %v365 = vunpack.c.l.b16 %v257
        %v366 = vunpack.c.l.b16 %v258
        %v367 = vunpack.c.l.b16 %v259
        %v368 = vunpack.c.l.b16 %v260
        %v369 = vunpack.c.l.b16 %v261
        %v370 = vunpack.c.l.b16 %v262
        %v371 = vunpack.c.l.b16 %v263
        %v372 = vunpack.c.l.b16 %v264
        %v373 = vunpack.c.l.b16 %v265
        %v374 = vunpack.c.l.b16 %v266
        %v375 = vunpack.c.l.b16 %v267
        %v376 = vunpack.c.l.b16 %v268
        %v377 = vunpack.c.l.b16 %v269
        %v378 = vunpack.c.l.b16 %v270
        %v379 = vunpack.c.l.b16 %v271
        %v380 = vunpack.c.l.b16 %v272
        %v381 = vunpack.c.l.b16 %v273
        %v382 = vunpack.c.l.b16 %v274
        %v383 = vunpack.c.l.b16 %v275
        %v384 = vunpack.c.l.b16 %v276
        %v385 = vunpack.c.l.b16 %v277
        %v386 = vpack.c.b16 %v351, %v350
        %v387 = vpack.c.b16 %v353, %v352
        %v388 = vpack.c.b16 %v355, %v354
        %v389 = vpack.c.b16 %v357, %v356
        %v390 = vpack.c.b16 %v359, %v358
        %v391 = vpack.c.b16 %v361, %v360
        %v392 = vpack.c.b16 %v363, %v362
        %v393 = vpack.c.b16 %v365, %v364
        %v394 = vpack.c.b16 %v367, %v366
        %v395 = vpack.c.b16 %v369, %v368
        %v396 = vpack.c.b16 %v371, %v370
        %v397 = vpack.c.b16 %v373, %v372
        %v398 = vpack.c.b16 %v375, %v374
        %v399 = vpack.c.b16 %v377, %v376
        %v400 = vpack.c.b16 %v379, %v378
        %v401 = vpack.c.b16 %v381, %v380
        %v402 = vpack.c.b16 %v383, %v382
        %v403 = vpack.c.b16 %v385, %v384
        %v422 = vunpack.c.l.b16 %v278
        %v423 = vunpack.c.l.b16 %v279
        %v424 = vunpack.c.l.b16 %v280
        %v425 = vunpack.c.l.b16 %v281
        %v426 = vunpack.c.l.b16 %v282
        %v427 = vunpack.c.l.b16 %v283
        %v428 = vunpack.c.l.b16 %v284
        %v429 = vunpack.c.l.b16 %v285
        %v430 = vunpack.c.l.b16 %v286
        %v431 = vunpack.c.l.b16 %v287
        %v432 = vunpack.c.l.b16 %v288
        %v433 = vunpack.c.l.b16 %v289
        %v434 = vunpack.c.l.b16 %v290
        %v435 = vunpack.c.l.b16 %v291
        %v436 = vunpack.c.l.b16 %v292
        %v437 = vunpack.c.l.b16 %v293
        %v438 = vunpack.c.l.b16 %v294
        %v439 = vunpack.c.l.b16 %v295
        %v440 = vpack.c.b16 %v422, %v422
        %v441 = vpack.c.b16 %v423, %v423
        %v442 = vpack.c.b16 %v424, %v424
        %v443 = vpack.c.b16 %v425, %v425
        %v444 = vpack.c.b16 %v426, %v426
        %v445 = vpack.c.b16 %v427, %v427
        %v446 = vpack.c.b16 %v428, %v428
        %v447 = vpack.c.b16 %v429, %v429
        %v448 = vpack.c.b16 %v430, %v430
        %v449 = vpack.c.b16 %v431, %v431
        %v450 = vpack.c.b16 %v432, %v432
        %v451 = vpack.c.b16 %v433, %v433
        %v452 = vpack.c.b16 %v434, %v434
        %v453 = vpack.c.b16 %v435, %v435
        %v454 = vpack.c.b16 %v436, %v436
        %v455 = vpack.c.b16 %v437, %v437
        %v456 = vpack.c.b16 %v438, %v438
        %v457 = vpack.c.b16 %v439, %v439
        %vm458 = vsmask.f32 7424
        %v460 = vshrl.u32 %v386, 16
        %v462 = vshll.u32 %v386, 16
        %v464 = vrot.slane %v462, 1
        %v465 = vor.u32 %v460, %v464
        %v467 = vshll.u32 %v440, 16
        %v469 = vrot.slane %v467, 1
        %v470 = vsel %vm458, %v465, %v469
        %v472 = vshrl.u32 %v387, 16
        %v474 = vshll.u32 %v387, 16
        %v476 = vrot.slane %v474, 1
        %v477 = vor.u32 %v472, %v476
        %v479 = vshll.u32 %v441, 16
        %v481 = vrot.slane %v479, 1
        %v482 = vsel %vm458, %v477, %v481
        %v484 = vshrl.u32 %v388, 16
        %v486 = vshll.u32 %v388, 16
        %v488 = vrot.slane %v486, 1
        %v489 = vor.u32 %v484, %v488
        %v491 = vshll.u32 %v442, 16
        %v493 = vrot.slane %v491, 1
        %v494 = vsel %vm458, %v489, %v493
        %v496 = vshrl.u32 %v389, 16
        %v498 = vshll.u32 %v389, 16
        %v500 = vrot.slane %v498, 1
        %v501 = vor.u32 %v496, %v500
        %v503 = vshll.u32 %v443, 16
        %v505 = vrot.slane %v503, 1
        %v506 = vsel %vm458, %v501, %v505
        %v508 = vshrl.u32 %v390, 16
        %v510 = vshll.u32 %v390, 16
        %v512 = vrot.slane %v510, 1
        %v513 = vor.u32 %v508, %v512
        %v515 = vshll.u32 %v444, 16
        %v517 = vrot.slane %v515, 1
        %v518 = vsel %vm458, %v513, %v517
        %v520 = vshrl.u32 %v391, 16
        %v522 = vshll.u32 %v391, 16
        %v524 = vrot.slane %v522, 1
        %v525 = vor.u32 %v520, %v524
        %v527 = vshll.u32 %v445, 16
        %v529 = vrot.slane %v527, 1
        %v530 = vsel %vm458, %v525, %v529
        %v532 = vshrl.u32 %v392, 16
        %v534 = vshll.u32 %v392, 16
        %v536 = vrot.slane %v534, 1
        %v537 = vor.u32 %v532, %v536
        %v539 = vshll.u32 %v446, 16
        %v541 = vrot.slane %v539, 1
        %v542 = vsel %vm458, %v537, %v541
        %v544 = vshrl.u32 %v393, 16
        %v546 = vshll.u32 %v393, 16
        %v548 = vrot.slane %v546, 1
        %v549 = vor.u32 %v544, %v548
        %v551 = vshll.u32 %v447, 16
        %v553 = vrot.slane %v551, 1
        %v554 = vsel %vm458, %v549, %v553
        %v556 = vshrl.u32 %v394, 16
        %v558 = vshll.u32 %v394, 16
        %v560 = vrot.slane %v558, 1
        %v561 = vor.u32 %v556, %v560
        %v563 = vshll.u32 %v448, 16
        %v565 = vrot.slane %v563, 1
        %v566 = vsel %vm458, %v561, %v565
        %v568 = vshrl.u32 %v395, 16
        %v570 = vshll.u32 %v395, 16
        %v572 = vrot.slane %v570, 1
        %v573 = vor.u32 %v568, %v572
        %v575 = vshll.u32 %v449, 16
        %v577 = vrot.slane %v575, 1
        %v578 = vsel %vm458, %v573, %v577
        %v580 = vshrl.u32 %v396, 16
        %v582 = vshll.u32 %v396, 16
        %v584 = vrot.slane %v582, 1
        %v585 = vor.u32 %v580, %v584
        %v587 = vshll.u32 %v450, 16
        %v589 = vrot.slane %v587, 1
        %v590 = vsel %vm458, %v585, %v589
        %v592 = vshrl.u32 %v397, 16
        %v594 = vshll.u32 %v397, 16
        %v596 = vrot.slane %v594, 1
        %v597 = vor.u32 %v592, %v596
        %v599 = vshll.u32 %v451, 16
        %v601 = vrot.slane %v599, 1
        %v602 = vsel %vm458, %v597, %v601
        %v604 = vshrl.u32 %v398, 16
        %v606 = vshll.u32 %v398, 16
        %v608 = vrot.slane %v606, 1
        %v609 = vor.u32 %v604, %v608
        %v611 = vshll.u32 %v452, 16
        %v613 = vrot.slane %v611, 1
        %v614 = vsel %vm458, %v609, %v613
        %v616 = vshrl.u32 %v399, 16
        %v618 = vshll.u32 %v399, 16
        %v620 = vrot.slane %v618, 1
        %v621 = vor.u32 %v616, %v620
        %v623 = vshll.u32 %v453, 16
        %v625 = vrot.slane %v623, 1
        %v626 = vsel %vm458, %v621, %v625
        %v628 = vshrl.u32 %v400, 16
        %v630 = vshll.u32 %v400, 16
        %v632 = vrot.slane %v630, 1
        %v633 = vor.u32 %v628, %v632
        %v635 = vshll.u32 %v454, 16
        %v637 = vrot.slane %v635, 1
        %v638 = vsel %vm458, %v633, %v637
        %v640 = vshrl.u32 %v401, 16
        %v642 = vshll.u32 %v401, 16
        %v644 = vrot.slane %v642, 1
        %v645 = vor.u32 %v640, %v644
        %v647 = vshll.u32 %v455, 16
        %v649 = vrot.slane %v647, 1
        %v650 = vsel %vm458, %v645, %v649
        %v652 = vshrl.u32 %v402, 16
        %v654 = vshll.u32 %v402, 16
        %v656 = vrot.slane %v654, 1
        %v657 = vor.u32 %v652, %v656
        %v659 = vshll.u32 %v456, 16
        %v661 = vrot.slane %v659, 1
        %v662 = vsel %vm458, %v657, %v661
        %v664 = vshrl.u32 %v403, 16
        %v666 = vshll.u32 %v403, 16
        %v668 = vrot.slane %v666, 1
        %v669 = vor.u32 %v664, %v668
        %v671 = vshll.u32 %v457, 16
        %v673 = vrot.slane %v671, 1
        %v674 = vsel %vm458, %v669, %v673
        %675 = vrot.lane.b32.xlu0 %v470, 16
        %v676 = vpop.permute.xlu0 %675
        %677 = vrot.lane.b32.xlu0 %v482, 16
        %v678 = vpop.permute.xlu0 %677
        %679 = vrot.lane.b32.xlu0 %v494, 16
        %v680 = vpop.permute.xlu0 %679
        %681 = vrot.lane.b32.xlu0 %v506, 16
        %v682 = vpop.permute.xlu0 %681
        %683 = vrot.lane.b32.xlu0 %v518, 16
        %v684 = vpop.permute.xlu0 %683
        %685 = vrot.lane.b32.xlu0 %v530, 16
        %v686 = vpop.permute.xlu0 %685
        %687 = vrot.lane.b32.xlu0 %v542, 16
        %v688 = vpop.permute.xlu0 %687
        %689 = vrot.lane.b32.xlu0 %v554, 16
        %v690 = vpop.permute.xlu0 %689
        %691 = vrot.lane.b32.xlu0 %v566, 16
        %v692 = vpop.permute.xlu0 %691
        %693 = vrot.lane.b32.xlu0 %v578, 16
        %v694 = vpop.permute.xlu0 %693
        %695 = vrot.lane.b32.xlu0 %v590, 16
        %v696 = vpop.permute.xlu0 %695
        %697 = vrot.lane.b32.xlu0 %v602, 16
        %v698 = vpop.permute.xlu0 %697
        %699 = vrot.lane.b32.xlu0 %v614, 16
        %v700 = vpop.permute.xlu0 %699
        %701 = vrot.lane.b32.xlu0 %v626, 16
        %v702 = vpop.permute.xlu0 %701
        %703 = vrot.lane.b32.xlu0 %v638, 16
        %v704 = vpop.permute.xlu0 %703
        %705 = vrot.lane.b32.xlu0 %v650, 16
        %v706 = vpop.permute.xlu0 %705
        %707 = vrot.lane.b32.xlu0 %v662, 16
        %v708 = vpop.permute.xlu0 %707
        %709 = vrot.lane.b32.xlu0 %v674, 16
        %v710 = vpop.permute.xlu0 %709
        %v729 = vunpack.c.l.b16 %v296
        %v730 = vunpack.c.l.b16 %v297
        %v731 = vunpack.c.l.b16 %v298
        %v732 = vunpack.c.l.b16 %v299
        %v733 = vunpack.c.l.b16 %v300
        %v734 = vunpack.c.l.b16 %v301
        %v735 = vunpack.c.l.b16 %v302
        %v736 = vunpack.c.l.b16 %v303
        %v737 = vunpack.c.l.b16 %v304
        %v738 = vunpack.c.l.b16 %v305
        %v739 = vunpack.c.l.b16 %v306
        %v740 = vunpack.c.l.b16 %v307
        %v741 = vunpack.c.l.b16 %v308
        %v742 = vunpack.c.l.b16 %v309
        %v743 = vunpack.c.l.b16 %v310
        %v744 = vunpack.c.l.b16 %v311
        %v745 = vunpack.c.l.b16 %v312
        %v746 = vunpack.c.l.b16 %v313
        %v747 = vpack.c.b16 %v351, %v729
        %v748 = vpack.c.b16 %v353, %v730
        %v749 = vpack.c.b16 %v355, %v731
        %v750 = vpack.c.b16 %v357, %v732
        %v751 = vpack.c.b16 %v359, %v733
        %v752 = vpack.c.b16 %v361, %v734
        %v753 = vpack.c.b16 %v363, %v735
        %v754 = vpack.c.b16 %v365, %v736
        %v755 = vpack.c.b16 %v367, %v737
        %v756 = vpack.c.b16 %v369, %v738
        %v757 = vpack.c.b16 %v371, %v739
        %v758 = vpack.c.b16 %v373, %v740
        %v759 = vpack.c.b16 %v375, %v741
        %v760 = vpack.c.b16 %v377, %v742
        %v761 = vpack.c.b16 %v379, %v743
        %v762 = vpack.c.b16 %v381, %v744
        %v763 = vpack.c.b16 %v383, %v745
        %v764 = vpack.c.b16 %v385, %v746
        %vm765 = vcmask 1046528
        %v766 = vrot.slane %v747, 1
        %v767 = vrot.slane %v440, 1
        %v768 = vsel %vm765, %v766, %v767
        %v769 = vrot.slane %v748, 1
        %v770 = vrot.slane %v441, 1
        %v771 = vsel %vm765, %v769, %v770
        %v772 = vrot.slane %v749, 1
        %v773 = vrot.slane %v442, 1
        %v774 = vsel %vm765, %v772, %v773
        %v775 = vrot.slane %v750, 1
        %v776 = vrot.slane %v443, 1
        %v777 = vsel %vm765, %v775, %v776
        %v778 = vrot.slane %v751, 1
        %v779 = vrot.slane %v444, 1
        %v780 = vsel %vm765, %v778, %v779
        %v781 = vrot.slane %v752, 1
        %v782 = vrot.slane %v445, 1
        %v783 = vsel %vm765, %v781, %v782
        %v784 = vrot.slane %v753, 1
        %v785 = vrot.slane %v446, 1
        %v786 = vsel %vm765, %v784, %v785
        %v787 = vrot.slane %v754, 1
        %v788 = vrot.slane %v447, 1
        %v789 = vsel %vm765, %v787, %v788
        %v790 = vrot.slane %v755, 1
        %v791 = vrot.slane %v448, 1
        %v792 = vsel %vm765, %v790, %v791
        %v793 = vrot.slane %v756, 1
        %v794 = vrot.slane %v449, 1
        %v795 = vsel %vm765, %v793, %v794
        %v796 = vrot.slane %v757, 1
        %v797 = vrot.slane %v450, 1
        %v798 = vsel %vm765, %v796, %v797
        %v799 = vrot.slane %v758, 1
        %v800 = vrot.slane %v451, 1
        %v801 = vsel %vm765, %v799, %v800
        %v802 = vrot.slane %v759, 1
        %v803 = vrot.slane %v452, 1
        %v804 = vsel %vm765, %v802, %v803
        %v805 = vrot.slane %v760, 1
        %v806 = vrot.slane %v453, 1
        %v807 = vsel %vm765, %v805, %v806
        %v808 = vrot.slane %v761, 1
        %v809 = vrot.slane %v454, 1
        %v810 = vsel %vm765, %v808, %v809
        %v811 = vrot.slane %v762, 1
        %v812 = vrot.slane %v455, 1
        %v813 = vsel %vm765, %v811, %v812
        %v814 = vrot.slane %v763, 1
        %v815 = vrot.slane %v456, 1
        %v816 = vsel %vm765, %v814, %v815
        %v817 = vrot.slane %v764, 1
        %v818 = vrot.slane %v457, 1
        %v819 = vsel %vm765, %v817, %v818
        %820 = vrot.lane.b32.xlu0 %v768, 32
        %v821 = vpop.permute.xlu0 %820
        %822 = vrot.lane.b32.xlu0 %v771, 32
        %v823 = vpop.permute.xlu0 %822
        %824 = vrot.lane.b32.xlu0 %v774, 32
        %v825 = vpop.permute.xlu0 %824
        %826 = vrot.lane.b32.xlu0 %v777, 32
        %v827 = vpop.permute.xlu0 %826
        %828 = vrot.lane.b32.xlu0 %v780, 32
        %v829 = vpop.permute.xlu0 %828
        %830 = vrot.lane.b32.xlu0 %v783, 32
        %v831 = vpop.permute.xlu0 %830
        %832 = vrot.lane.b32.xlu0 %v786, 32
        %v833 = vpop.permute.xlu0 %832
        %834 = vrot.lane.b32.xlu0 %v789, 32
        %v835 = vpop.permute.xlu0 %834
        %836 = vrot.lane.b32.xlu0 %v792, 32
        %v837 = vpop.permute.xlu0 %836
        %838 = vrot.lane.b32.xlu0 %v795, 32
        %v839 = vpop.permute.xlu0 %838
        %840 = vrot.lane.b32.xlu0 %v798, 32
        %v841 = vpop.permute.xlu0 %840
        %842 = vrot.lane.b32.xlu0 %v801, 32
        %v843 = vpop.permute.xlu0 %842
        %844 = vrot.lane.b32.xlu0 %v804, 32
        %v845 = vpop.permute.xlu0 %844
        %846 = vrot.lane.b32.xlu0 %v807, 32
        %v847 = vpop.permute.xlu0 %846
        %848 = vrot.lane.b32.xlu0 %v810, 32
        %v849 = vpop.permute.xlu0 %848
        %850 = vrot.lane.b32.xlu0 %v813, 32
        %v851 = vpop.permute.xlu0 %850
        %852 = vrot.lane.b32.xlu0 %v816, 32
        %v853 = vpop.permute.xlu0 %852
        %854 = vrot.lane.b32.xlu0 %v819, 32
        %v855 = vpop.permute.xlu0 %854
        %vm856 = vcmask 130048
        %v858 = vsel %vm856, %v386, %v676
        %v860 = vsel %vm856, %v387, %v678
        %v862 = vsel %vm856, %v388, %v680
        %v864 = vsel %vm856, %v389, %v682
        %v866 = vsel %vm856, %v390, %v684
        %v868 = vsel %vm856, %v391, %v686
        %v870 = vsel %vm856, %v392, %v688
        %v872 = vsel %vm856, %v393, %v690
        %v874 = vsel %vm856, %v394, %v692
        %v876 = vsel %vm856, %v395, %v694
        %v878 = vsel %vm856, %v396, %v696
        %v880 = vsel %vm856, %v397, %v698
        %v882 = vsel %vm856, %v398, %v700
        %v884 = vsel %vm856, %v399, %v702
        %v886 = vsel %vm856, %v400, %v704
        %v888 = vsel %vm856, %v401, %v706
        %v890 = vsel %vm856, %v402, %v708
        %v892 = vsel %vm856, %v403, %v710
        %vm893 = vcmask 261120
        %v895 = vsel %vm893, %v858, %v821
        %v897 = vsel %vm893, %v860, %v823
        %v899 = vsel %vm893, %v862, %v825
        %v901 = vsel %vm893, %v864, %v827
        %v903 = vsel %vm893, %v866, %v829
        %v905 = vsel %vm893, %v868, %v831
        %v907 = vsel %vm893, %v870, %v833
        %v909 = vsel %vm893, %v872, %v835
        %v911 = vsel %vm893, %v874, %v837
        %v913 = vsel %vm893, %v876, %v839
        %v915 = vsel %vm893, %v878, %v841
        %v917 = vsel %vm893, %v880, %v843
        %v919 = vsel %vm893, %v882, %v845
        %v921 = vsel %vm893, %v884, %v847
        %v923 = vsel %vm893, %v886, %v849
        %v925 = vsel %vm893, %v888, %v851
        %v927 = vsel %vm893, %v890, %v853
        %v929 = vsel %vm893, %v892, %v855
        %v930 = vld [vmem:[%s235] sm:$0xf]
        %v931 = vld [vmem:[%s235 + $0x4] sm:$0xf]
        %v932 = vld [vmem:[%s235 + $0x8] sm:$0xf]
        %v933 = vld [vmem:[%s235 + $0xc] sm:$0xf]
        %v934 = vld [vmem:[%s235 + $0x10] sm:$0xf]
        %v935 = vld [vmem:[%s235 + $0x14] sm:$0xf]
        %s936 = scalar_lea.vmem %s235, 24
        %v937 = vld [vmem:[%s936] sm:$0xf]
        %v938 = vld [vmem:[%s936 + $0x4] sm:$0xf]
        %v939 = vld [vmem:[%s936 + $0x8] sm:$0xf]
        %v940 = vld [vmem:[%s936 + $0xc] sm:$0xf]
        %v941 = vld [vmem:[%s936 + $0x10] sm:$0xf]
        %v942 = vld [vmem:[%s936 + $0x14] sm:$0xf]
        %v949 = vunpack.c.l.b16 %v937
        %v950 = vunpack.c.l.b16 %v938
        %v951 = vunpack.c.l.b16 %v939
        %v952 = vunpack.c.l.b16 %v940
        %v953 = vunpack.c.l.b16 %v941
        %v954 = vunpack.c.l.b16 %v942
        %v955 = vpack.c.b16 %v950, %v949
        %v956 = vpack.c.b16 %v952, %v951
        %v957 = vpack.c.b16 %v954, %v953
        %vm961 = vcmask 392192
        %v962 = vsel %vm961, %v897, 0
        %v964 = vsel %vm961, %v899, 0
        %v966 = vsel %vm961, %v901, 0
        %v968 = vsel %vm961, %v903, 0
        %v970 = vsel %vm961, %v905, 0
        %v972 = vsel %vm961, %v907, 0
        %v974 = vsel %vm961, %v909, 0
        %v976 = vsel %vm961, %v911, 0
        %v978 = vsel %vm961, %v913, 0
        %v980 = vsel %vm961, %v915, 0
        %v982 = vsel %vm961, %v917, 0
        %v984 = vsel %vm961, %v919, 0
        %v986 = vsel %vm961, %v921, 0
        %v988 = vsel %vm961, %v923, 0
        %v990 = vsel %vm961, %v925, 0
        %v992 = vsel %vm961, %v927, 0
        %994 = vmatprep.subr.bf16.mxu0 0
        %995 = vmatpush1.bf16.msra.mxu0 %v955
        %996 = vmatprep.subr.bf16.mxu0 0
        %997 = vmatpush1.bf16.msra.mxu0 %v956
        %998 = vmatprep.subr.bf16.mxu0 0
        %999 = vmatpush1.bf16.msra.mxu0 %v957
        %1000 = vmatprep.subr.bf16.mxu0 0
        %1001 = vmatpush1.bf16.msra.mxu0 0
        %1002 = vmatprep.subr.bf16.mxu0 0
        %1003 = vmatpush1.bf16.msra.mxu0 0
        %1004 = vmatprep.subr.bf16.mxu0 0
        %1005 = vmatpush1.bf16.msra.mxu0 0
        %1006 = vmatprep.subr.bf16.mxu0 0
        %1007 = vmatpush1.bf16.msra.mxu0 0
        %1008 = vmatprep.subr.bf16.mxu0 0
        %1009 = vmatpush1.bf16.msra.mxu0 0
        %1010 = vmatprep.subr.bf16.mxu0 0
        %1011 = vmatpush1.bf16.msra.mxu0 0
        %1012 = vmatprep.subr.bf16.mxu0 0
        %1013 = vmatpush1.bf16.msra.mxu0 0
        %1014 = vmatprep.subr.bf16.mxu0 0
        %1015 = vmatpush1.bf16.msra.mxu0 0
        %1016 = vmatprep.subr.bf16.mxu0 0
        %1017 = vmatpush1.bf16.msra.mxu0 0
        %1018 = vmatprep.subr.bf16.mxu0 0
        %1019 = vmatpush1.bf16.msra.mxu0 0
        %1020 = vmatprep.subr.bf16.mxu0 0
        %1021 = vmatpush1.bf16.msra.mxu0 0
        %1022 = vmatprep.subr.bf16.mxu0 0
        %1023 = vmatpush1.bf16.msra.mxu0 0
        %1024 = vmatprep.subr.bf16.mxu0 0
        %1025 = vmatpush1.bf16.msra.mxu0 0
        %1026 = vmatprep.mubr.bf16.mxu0 0
        %1027 = vmatmul.mubr.bf16.gmra.mrb[0].mxu0 %v962
        %v1028 = vpop.f32.mrb[0].mxu0
        %v1029 = vadd.f32 0.0, %v1028
        %v1030 = vpop.f32.mrb[0].mxu0
        %v1031 = vpop.f32.mrb[0].mxu0
        %v1032 = vadd.f32 0.0, %v1031
        %v1033 = vpop.f32.mrb[0].mxu0
        %1034 = vmatprep.mubr.bf16.mxu0 0
        %1035 = vmatmul.mubr.bf16.gmra.mrb[0].mxu0 %v964
        %v1036 = vpop.f32.mrb[0].mxu0
        %v1037 = vadd.f32 0.0, %v1036
        %v1038 = vpop.f32.mrb[0].mxu0
        %v1039 = vpop.f32.mrb[0].mxu0
        %v1040 = vadd.f32 0.0, %v1039
        %v1041 = vpop.f32.mrb[0].mxu0
        %1042 = vmatprep.mubr.bf16.mxu0 0
        %1043 = vmatmul.mubr.bf16.gmra.mrb[0].mxu0 %v966
        %v1044 = vpop.f32.mrb[0].mxu0
        %v1045 = vadd.f32 0.0, %v1044
        %v1046 = vpop.f32.mrb[0].mxu0
        %v1047 = vpop.f32.mrb[0].mxu0
        %v1048 = vadd.f32 0.0, %v1047
        %v1049 = vpop.f32.mrb[0].mxu0
        %1050 = vmatprep.mubr.bf16.mxu0 0
        %1051 = vmatmul.mubr.bf16.gmra.mrb[0].mxu0 %v968
        %v1052 = vpop.f32.mrb[0].mxu0
        %v1053 = vadd.f32 0.0, %v1052
        %v1054 = vpop.f32.mrb[0].mxu0
        %v1055 = vpop.f32.mrb[0].mxu0
        %v1056 = vadd.f32 0.0, %v1055
        %v1057 = vpop.f32.mrb[0].mxu0
        %1058 = vmatprep.mubr.bf16.mxu0 0
        %1059 = vmatmul.mubr.bf16.gmra.mrb[0].mxu0 %v970
        %v1060 = vpop.f32.mrb[0].mxu0
        %v1061 = vadd.f32 0.0, %v1060
        %v1062 = vpop.f32.mrb[0].mxu0
        %v1063 = vpop.f32.mrb[0].mxu0
        %v1064 = vadd.f32 0.0, %v1063
        %v1065 = vpop.f32.mrb[0].mxu0
        %1066 = vmatprep.mubr.bf16.mxu0 0
        %1067 = vmatmul.mubr.bf16.gmra.mrb[0].mxu0 %v972
        %v1068 = vpop.f32.mrb[0].mxu0
        %v1069 = vadd.f32 0.0, %v1068
        %v1070 = vpop.f32.mrb[0].mxu0
        %v1071 = vpop.f32.mrb[0].mxu0
        %v1072 = vadd.f32 0.0, %v1071
        %v1073 = vpop.f32.mrb[0].mxu0
        %1074 = vmatprep.mubr.bf16.mxu0 0
        %1075 = vmatmul.mubr.bf16.gmra.mrb[0].mxu0 %v974
        %v1076 = vpop.f32.mrb[0].mxu0
        %v1077 = vadd.f32 0.0, %v1076
        %v1078 = vpop.f32.mrb[0].mxu0
        %v1079 = vpop.f32.mrb[0].mxu0
        %v1080 = vadd.f32 0.0, %v1079
        %v1081 = vpop.f32.mrb[0].mxu0
        %1082 = vmatprep.mubr.bf16.mxu0 0
        %1083 = vmatmul.mubr.bf16.gmra.mrb[0].mxu0 %v976
        %v1084 = vpop.f32.mrb[0].mxu0
        %v1085 = vadd.f32 0.0, %v1084
        %v1086 = vpop.f32.mrb[0].mxu0
        %v1087 = vpop.f32.mrb[0].mxu0
        %v1088 = vadd.f32 0.0, %v1087
        %v1089 = vpop.f32.mrb[0].mxu0
        %1090 = vmatprep.mubr.bf16.mxu0 0
        %1091 = vmatmul.mubr.bf16.gmra.mrb[0].mxu0 %v978
        %v1092 = vpop.f32.mrb[0].mxu0
        %v1093 = vadd.f32 0.0, %v1092
        %v1094 = vpop.f32.mrb[0].mxu0
        %v1095 = vpop.f32.mrb[0].mxu0
        %v1096 = vadd.f32 0.0, %v1095
        %v1097 = vpop.f32.mrb[0].mxu0
        %1098 = vmatprep.mubr.bf16.mxu0 0
        %1099 = vmatmul.mubr.bf16.gmra.mrb[0].mxu0 %v980
        %v1100 = vpop.f32.mrb[0].mxu0
        %v1101 = vadd.f32 0.0, %v1100
        %v1102 = vpop.f32.mrb[0].mxu0
        %v1103 = vpop.f32.mrb[0].mxu0
        %v1104 = vadd.f32 0.0, %v1103
        %v1105 = vpop.f32.mrb[0].mxu0
        %1106 = vmatprep.mubr.bf16.mxu0 0
        %1107 = vmatmul.mubr.bf16.gmra.mrb[0].mxu0 %v982
        %v1108 = vpop.f32.mrb[0].mxu0
        %v1109 = vadd.f32 0.0, %v1108
        %v1110 = vpop.f32.mrb[0].mxu0
        %v1111 = vpop.f32.mrb[0].mxu0
        %v1112 = vadd.f32 0.0, %v1111
        %v1113 = vpop.f32.mrb[0].mxu0
        %1114 = vmatprep.mubr.bf16.mxu0 0
        %1115 = vmatmul.mubr.bf16.gmra.mrb[0].mxu0 %v984
        %v1116 = vpop.f32.mrb[0].mxu0
        %v1117 = vadd.f32 0.0, %v1116
        %v1118 = vpop.f32.mrb[0].mxu0
        %v1119 = vpop.f32.mrb[0].mxu0
        %v1120 = vadd.f32 0.0, %v1119
        %v1121 = vpop.f32.mrb[0].mxu0
        %1122 = vmatprep.mubr.bf16.mxu0 0
        %1123 = vmatmul.mubr.bf16.gmra.mrb[0].mxu0 %v986
        %v1124 = vpop.f32.mrb[0].mxu0
        %v1125 = vadd.f32 0.0, %v1124
        %v1126 = vpop.f32.mrb[0].mxu0
        %v1127 = vpop.f32.mrb[0].mxu0
        %v1128 = vadd.f32 0.0, %v1127
        %v1129 = vpop.f32.mrb[0].mxu0
        %1130 = vmatprep.mubr.bf16.mxu0 0
        %1131 = vmatmul.mubr.bf16.gmra.mrb[0].mxu0 %v988
        %v1132 = vpop.f32.mrb[0].mxu0
        %v1133 = vadd.f32 0.0, %v1132
        %v1134 = vpop.f32.mrb[0].mxu0
        %v1135 = vpop.f32.mrb[0].mxu0
        %v1136 = vadd.f32 0.0, %v1135
        %v1137 = vpop.f32.mrb[0].mxu0
        %1138 = vmatprep.mubr.bf16.mxu0 0
        %1139 = vmatmul.mubr.bf16.gmra.mrb[0].mxu0 %v990
        %v1140 = vpop.f32.mrb[0].mxu0
        %v1141 = vadd.f32 0.0, %v1140
        %v1142 = vpop.f32.mrb[0].mxu0
        %v1143 = vpop.f32.mrb[0].mxu0
        %v1144 = vadd.f32 0.0, %v1143
        %v1145 = vpop.f32.mrb[0].mxu0
        %1146 = vmatprep.mubr.bf16.mxu0 0
        %1147 = vmatmul.mubr.bf16.gmra.mrb[0].mxu0 %v992
        %v1148 = vpop.f32.mrb[0].mxu0
        %v1149 = vadd.f32 0.0, %v1148
        %v1150 = vpop.f32.mrb[0].mxu0
        %v1151 = vpop.f32.mrb[0].mxu0
        %v1152 = vadd.f32 0.0, %v1151
        %v1153 = vpop.f32.mrb[0].mxu0
        %1154 = vdwg.mxu0
        %v1161 = vunpack.c.l.b16 %v930
        %v1162 = vunpack.c.l.b16 %v931
        %v1163 = vunpack.c.l.b16 %v932
        %v1164 = vunpack.c.l.b16 %v933
        %v1165 = vunpack.c.l.b16 %v934
        %v1166 = vunpack.c.l.b16 %v935
        %v1167 = vpack.c.b16 %v1162, %v1161
        %v1168 = vpack.c.b16 %v1164, %v1163
        %v1169 = vpack.c.b16 %v1166, %v1165
        %v1173 = vsel %vm961, %v895, 0
        %1175 = vmatprep.subr.bf16.mxu0 0
        %1176 = vmatpush1.bf16.msra.mxu0 %v1167
        %1177 = vmatprep.subr.bf16.mxu0 0
        %1178 = vmatpush1.bf16.msra.mxu0 %v1168
        %1179 = vmatprep.subr.bf16.mxu0 0
        %1180 = vmatpush1.bf16.msra.mxu0 %v1169
        %1181 = vmatprep.subr.bf16.mxu0 0
        %1182 = vmatpush1.bf16.msra.mxu0 0
        %1183 = vmatprep.subr.bf16.mxu0 0
        %1184 = vmatpush1.bf16.msra.mxu0 0
        %1185 = vmatprep.subr.bf16.mxu0 0
        %1186 = vmatpush1.bf16.msra.mxu0 0
        %1187 = vmatprep.subr.bf16.mxu0 0
        %1188 = vmatpush1.bf16.msra.mxu0 0
        %1189 = vmatprep.subr.bf16.mxu0 0
        %1190 = vmatpush1.bf16.msra.mxu0 0
        %1191 = vmatprep.subr.bf16.mxu0 0
        %1192 = vmatpush1.bf16.msra.mxu0 0
        %1193 = vmatprep.subr.bf16.mxu0 0
        %1194 = vmatpush1.bf16.msra.mxu0 0
        %1195 = vmatprep.subr.bf16.mxu0 0
        %1196 = vmatpush1.bf16.msra.mxu0 0
        %1197 = vmatprep.subr.bf16.mxu0 0
        %1198 = vmatpush1.bf16.msra.mxu0 0
        %1199 = vmatprep.subr.bf16.mxu0 0
        %1200 = vmatpush1.bf16.msra.mxu0 0
        %1201 = vmatprep.subr.bf16.mxu0 0
        %1202 = vmatpush1.bf16.msra.mxu0 0
        %1203 = vmatprep.subr.bf16.mxu0 0
        %1204 = vmatpush1.bf16.msra.mxu0 0
        %1205 = vmatprep.subr.bf16.mxu0 0
        %1206 = vmatpush1.bf16.msra.mxu0 0
        %1207 = vmatprep.mubr.bf16.mxu0 0
        %1208 = vmatmul.mubr.bf16.gmra.mrb[0].mxu0 %v1173
        %v1209 = vpop.f32.mrb[0].mxu0
        %v1210 = vadd.f32 %v1029, %v1209
        %v1211 = vpop.f32.mrb[0].mxu0
        %v1212 = vpop.f32.mrb[0].mxu0
        %v1213 = vadd.f32 %v1032, %v1212
        %v1214 = vpop.f32.mrb[0].mxu0
        %1215 = vmatprep.mubr.bf16.mxu0 0
        %1216 = vmatmul.mubr.bf16.gmra.mrb[0].mxu0 %v962
        %v1217 = vpop.f32.mrb[0].mxu0
        %v1218 = vadd.f32 %v1037, %v1217
        %v1219 = vpop.f32.mrb[0].mxu0
        %v1220 = vpop.f32.mrb[0].mxu0
        %v1221 = vadd.f32 %v1040, %v1220
        %v1222 = vpop.f32.mrb[0].mxu0
        %1223 = vmatprep.mubr.bf16.mxu0 0
        %1224 = vmatmul.mubr.bf16.gmra.mrb[0].mxu0 %v964
        %v1225 = vpop.f32.mrb[0].mxu0
        %v1226 = vadd.f32 %v1045, %v1225
        %v1227 = vpop.f32.mrb[0].mxu0
        %v1228 = vpop.f32.mrb[0].mxu0
        %v1229 = vadd.f32 %v1048, %v1228
        %v1230 = vpop.f32.mrb[0].mxu0
        %1231 = vmatprep.mubr.bf16.mxu0 0
        %1232 = vmatmul.mubr.bf16.gmra.mrb[0].mxu0 %v966
        %v1233 = vpop.f32.mrb[0].mxu0
        %v1234 = vadd.f32 %v1053, %v1233
        %v1235 = vpop.f32.mrb[0].mxu0
        %v1236 = vpop.f32.mrb[0].mxu0
        %v1237 = vadd.f32 %v1056, %v1236
        %v1238 = vpop.f32.mrb[0].mxu0
        %1239 = vmatprep.mubr.bf16.mxu0 0
        %1240 = vmatmul.mubr.bf16.gmra.mrb[0].mxu0 %v968
        %v1241 = vpop.f32.mrb[0].mxu0
        %v1242 = vadd.f32 %v1061, %v1241
        %v1243 = vpop.f32.mrb[0].mxu0
        %v1244 = vpop.f32.mrb[0].mxu0
        %v1245 = vadd.f32 %v1064, %v1244
        %v1246 = vpop.f32.mrb[0].mxu0
        %1247 = vmatprep.mubr.bf16.mxu0 0
        %1248 = vmatmul.mubr.bf16.gmra.mrb[0].mxu0 %v970
        %v1249 = vpop.f32.mrb[0].mxu0
        %v1250 = vadd.f32 %v1069, %v1249
        %v1251 = vpop.f32.mrb[0].mxu0
        %v1252 = vpop.f32.mrb[0].mxu0
        %v1253 = vadd.f32 %v1072, %v1252
        %v1254 = vpop.f32.mrb[0].mxu0
        %1255 = vmatprep.mubr.bf16.mxu0 0
        %1256 = vmatmul.mubr.bf16.gmra.mrb[0].mxu0 %v972
        %v1257 = vpop.f32.mrb[0].mxu0
        %v1258 = vadd.f32 %v1077, %v1257
        %v1259 = vpop.f32.mrb[0].mxu0
        %v1260 = vpop.f32.mrb[0].mxu0
        %v1261 = vadd.f32 %v1080, %v1260
        %v1262 = vpop.f32.mrb[0].mxu0
        %1263 = vmatprep.mubr.bf16.mxu0 0
        %1264 = vmatmul.mubr.bf16.gmra.mrb[0].mxu0 %v974
        %v1265 = vpop.f32.mrb[0].mxu0
        %v1266 = vadd.f32 %v1085, %v1265
        %v1267 = vpop.f32.mrb[0].mxu0
        %v1268 = vpop.f32.mrb[0].mxu0
        %v1269 = vadd.f32 %v1088, %v1268
        %v1270 = vpop.f32.mrb[0].mxu0
        %1271 = vmatprep.mubr.bf16.mxu0 0
        %1272 = vmatmul.mubr.bf16.gmra.mrb[0].mxu0 %v976
        %v1273 = vpop.f32.mrb[0].mxu0
        %v1274 = vadd.f32 %v1093, %v1273
        %v1275 = vpop.f32.mrb[0].mxu0
        %v1276 = vpop.f32.mrb[0].mxu0
        %v1277 = vadd.f32 %v1096, %v1276
        %v1278 = vpop.f32.mrb[0].mxu0
        %1279 = vmatprep.mubr.bf16.mxu0 0
        %1280 = vmatmul.mubr.bf16.gmra.mrb[0].mxu0 %v978
        %v1281 = vpop.f32.mrb[0].mxu0
        %v1282 = vadd.f32 %v1101, %v1281
        %v1283 = vpop.f32.mrb[0].mxu0
        %v1284 = vpop.f32.mrb[0].mxu0
        %v1285 = vadd.f32 %v1104, %v1284
        %v1286 = vpop.f32.mrb[0].mxu0
        %1287 = vmatprep.mubr.bf16.mxu0 0
        %1288 = vmatmul.mubr.bf16.gmra.mrb[0].mxu0 %v980
        %v1289 = vpop.f32.mrb[0].mxu0
        %v1290 = vadd.f32 %v1109, %v1289
        %v1291 = vpop.f32.mrb[0].mxu0
        %v1292 = vpop.f32.mrb[0].mxu0
        %v1293 = vadd.f32 %v1112, %v1292
        %v1294 = vpop.f32.mrb[0].mxu0
        %1295 = vmatprep.mubr.bf16.mxu0 0
        %1296 = vmatmul.mubr.bf16.gmra.mrb[0].mxu0 %v982
        %v1297 = vpop.f32.mrb[0].mxu0
        %v1298 = vadd.f32 %v1117, %v1297
        %v1299 = vpop.f32.mrb[0].mxu0
        %v1300 = vpop.f32.mrb[0].mxu0
        %v1301 = vadd.f32 %v1120, %v1300
        %v1302 = vpop.f32.mrb[0].mxu0
        %1303 = vmatprep.mubr.bf16.mxu0 0
        %1304 = vmatmul.mubr.bf16.gmra.mrb[0].mxu0 %v984
        %v1305 = vpop.f32.mrb[0].mxu0
        %v1306 = vadd.f32 %v1125, %v1305
        %v1307 = vpop.f32.mrb[0].mxu0
        %v1308 = vpop.f32.mrb[0].mxu0
        %v1309 = vadd.f32 %v1128, %v1308
        %v1310 = vpop.f32.mrb[0].mxu0
        %1311 = vmatprep.mubr.bf16.mxu0 0
        %1312 = vmatmul.mubr.bf16.gmra.mrb[0].mxu0 %v986
        %v1313 = vpop.f32.mrb[0].mxu0
        %v1314 = vadd.f32 %v1133, %v1313
        %v1315 = vpop.f32.mrb[0].mxu0
        %v1316 = vpop.f32.mrb[0].mxu0
        %v1317 = vadd.f32 %v1136, %v1316
        %v1318 = vpop.f32.mrb[0].mxu0
        %1319 = vmatprep.mubr.bf16.mxu0 0
        %1320 = vmatmul.mubr.bf16.gmra.mrb[0].mxu0 %v988
        %v1321 = vpop.f32.mrb[0].mxu0
        %v1322 = vadd.f32 %v1141, %v1321
        %v1323 = vpop.f32.mrb[0].mxu0
        %v1324 = vpop.f32.mrb[0].mxu0
        %v1325 = vadd.f32 %v1144, %v1324
        %v1326 = vpop.f32.mrb[0].mxu0
        %1327 = vmatprep.mubr.bf16.mxu0 0
        %1328 = vmatmul.mubr.bf16.gmra.mrb[0].mxu0 %v990
        %v1329 = vpop.f32.mrb[0].mxu0
        %v1330 = vadd.f32 %v1149, %v1329
        %v1331 = vpop.f32.mrb[0].mxu0
        %v1332 = vpop.f32.mrb[0].mxu0
        %v1333 = vadd.f32 %v1152, %v1332
        %v1334 = vpop.f32.mrb[0].mxu0
        %1335 = vdwg.mxu0
        %s1336 = scalar_lea.vmem %s235, 48
        %v1337 = vld [vmem:[%s1336] sm:$0xf]
        %v1338 = vld [vmem:[%s1336 + $0x4] sm:$0xf]
        %v1339 = vld [vmem:[%s1336 + $0x8] sm:$0xf]
        %v1340 = vld [vmem:[%s1336 + $0xc] sm:$0xf]
        %v1341 = vld [vmem:[%s1336 + $0x10] sm:$0xf]
        %v1342 = vld [vmem:[%s1336 + $0x14] sm:$0xf]
        %v1349 = vunpack.c.l.b16 %v1337
        %v1350 = vunpack.c.l.b16 %v1338
        %v1351 = vunpack.c.l.b16 %v1339
        %v1352 = vunpack.c.l.b16 %v1340
        %v1353 = vunpack.c.l.b16 %v1341
        %v1354 = vunpack.c.l.b16 %v1342
        %v1355 = vpack.c.b16 %v1350, %v1349
        %v1356 = vpack.c.b16 %v1352, %v1351
        %v1357 = vpack.c.b16 %v1354, %v1353
        %v1361 = vsel %vm961, %v929, 0
        %1363 = vmatprep.subr.bf16.mxu0 0
        %1364 = vmatpush1.bf16.msra.mxu0 %v1355
        %1365 = vmatprep.subr.bf16.mxu0 0
        %1366 = vmatpush1.bf16.msra.mxu0 %v1356
        %1367 = vmatprep.subr.bf16.mxu0 0
        %1368 = vmatpush1.bf16.msra.mxu0 %v1357
        %1369 = vmatprep.subr.bf16.mxu0 0
        %1370 = vmatpush1.bf16.msra.mxu0 0
        %1371 = vmatprep.subr.bf16.mxu0 0
        %1372 = vmatpush1.bf16.msra.mxu0 0
        %1373 = vmatprep.subr.bf16.mxu0 0
        %1374 = vmatpush1.bf16.msra.mxu0 0
        %1375 = vmatprep.subr.bf16.mxu0 0
        %1376 = vmatpush1.bf16.msra.mxu0 0
        %1377 = vmatprep.subr.bf16.mxu0 0
        %1378 = vmatpush1.bf16.msra.mxu0 0
        %1379 = vmatprep.subr.bf16.mxu0 0
        %1380 = vmatpush1.bf16.msra.mxu0 0
        %1381 = vmatprep.subr.bf16.mxu0 0
        %1382 = vmatpush1.bf16.msra.mxu0 0
        %1383 = vmatprep.subr.bf16.mxu0 0
        %1384 = vmatpush1.bf16.msra.mxu0 0
        %1385 = vmatprep.subr.bf16.mxu0 0
        %1386 = vmatpush1.bf16.msra.mxu0 0
        %1387 = vmatprep.subr.bf16.mxu0 0
        %1388 = vmatpush1.bf16.msra.mxu0 0
        %1389 = vmatprep.subr.bf16.mxu0 0
        %1390 = vmatpush1.bf16.msra.mxu0 0
        %1391 = vmatprep.subr.bf16.mxu0 0
        %1392 = vmatpush1.bf16.msra.mxu0 0
        %1393 = vmatprep.subr.bf16.mxu0 0
        %1394 = vmatpush1.bf16.msra.mxu0 0
        %1395 = vmatprep.mubr.bf16.mxu0 0
        %1396 = vmatmul.mubr.bf16.gmra.mrb[0].mxu0 %v964
        %v1397 = vpop.f32.mrb[0].mxu0
        %v1398 = vadd.f32 0.0, %v1397
        %v1399 = vpop.f32.mrb[0].mxu0
        %v1400 = vpop.f32.mrb[0].mxu0
        %v1401 = vadd.f32 0.0, %v1400
        %v1402 = vpop.f32.mrb[0].mxu0
        %1403 = vmatprep.mubr.bf16.mxu0 0
        %1404 = vmatmul.mubr.bf16.gmra.mrb[0].mxu0 %v966
        %v1405 = vpop.f32.mrb[0].mxu0
        %v1406 = vadd.f32 0.0, %v1405
        %v1407 = vpop.f32.mrb[0].mxu0
        %v1408 = vpop.f32.mrb[0].mxu0
        %v1409 = vadd.f32 0.0, %v1408
        %v1410 = vpop.f32.mrb[0].mxu0
        %1411 = vmatprep.mubr.bf16.mxu0 0
        %1412 = vmatmul.mubr.bf16.gmra.mrb[0].mxu0 %v968
        %v1413 = vpop.f32.mrb[0].mxu0
        %v1414 = vadd.f32 0.0, %v1413
        %v1415 = vpop.f32.mrb[0].mxu0
        %v1416 = vpop.f32.mrb[0].mxu0
        %v1417 = vadd.f32 0.0, %v1416
        %v1418 = vpop.f32.mrb[0].mxu0
        %1419 = vmatprep.mubr.bf16.mxu0 0
        %1420 = vmatmul.mubr.bf16.gmra.mrb[0].mxu0 %v970
        %v1421 = vpop.f32.mrb[0].mxu0
        %v1422 = vadd.f32 0.0, %v1421
        %v1423 = vpop.f32.mrb[0].mxu0
        %v1424 = vpop.f32.mrb[0].mxu0
        %v1425 = vadd.f32 0.0, %v1424
        %v1426 = vpop.f32.mrb[0].mxu0
        %1427 = vmatprep.mubr.bf16.mxu0 0
        %1428 = vmatmul.mubr.bf16.gmra.mrb[0].mxu0 %v972
        %v1429 = vpop.f32.mrb[0].mxu0
        %v1430 = vadd.f32 0.0, %v1429
        %v1431 = vpop.f32.mrb[0].mxu0
        %v1432 = vpop.f32.mrb[0].mxu0
        %v1433 = vadd.f32 0.0, %v1432
        %v1434 = vpop.f32.mrb[0].mxu0
        %1435 = vmatprep.mubr.bf16.mxu0 0
        %1436 = vmatmul.mubr.bf16.gmra.mrb[0].mxu0 %v974
        %v1437 = vpop.f32.mrb[0].mxu0
        %v1438 = vadd.f32 0.0, %v1437
        %v1439 = vpop.f32.mrb[0].mxu0
        %v1440 = vpop.f32.mrb[0].mxu0
        %v1441 = vadd.f32 0.0, %v1440
        %v1442 = vpop.f32.mrb[0].mxu0
        %1443 = vmatprep.mubr.bf16.mxu0 0
        %1444 = vmatmul.mubr.bf16.gmra.mrb[0].mxu0 %v976
        %v1445 = vpop.f32.mrb[0].mxu0
        %v1446 = vadd.f32 0.0, %v1445
        %v1447 = vpop.f32.mrb[0].mxu0
        %v1448 = vpop.f32.mrb[0].mxu0
        %v1449 = vadd.f32 0.0, %v1448
        %v1450 = vpop.f32.mrb[0].mxu0
        %1451 = vmatprep.mubr.bf16.mxu0 0
        %1452 = vmatmul.mubr.bf16.gmra.mrb[0].mxu0 %v978
        %v1453 = vpop.f32.mrb[0].mxu0
        %v1454 = vadd.f32 0.0, %v1453
        %v1455 = vpop.f32.mrb[0].mxu0
        %v1456 = vpop.f32.mrb[0].mxu0
        %v1457 = vadd.f32 0.0, %v1456
        %v1458 = vpop.f32.mrb[0].mxu0
        %1459 = vmatprep.mubr.bf16.mxu0 0
        %1460 = vmatmul.mubr.bf16.gmra.mrb[0].mxu0 %v980
        %v1461 = vpop.f32.mrb[0].mxu0
        %v1462 = vadd.f32 0.0, %v1461
        %v1463 = vpop.f32.mrb[0].mxu0
        %v1464 = vpop.f32.mrb[0].mxu0
        %v1465 = vadd.f32 0.0, %v1464
        %v1466 = vpop.f32.mrb[0].mxu0
        %1467 = vmatprep.mubr.bf16.mxu0 0
        %1468 = vmatmul.mubr.bf16.gmra.mrb[0].mxu0 %v982
        %v1469 = vpop.f32.mrb[0].mxu0
        %v1470 = vadd.f32 0.0, %v1469
        %v1471 = vpop.f32.mrb[0].mxu0
        %v1472 = vpop.f32.mrb[0].mxu0
        %v1473 = vadd.f32 0.0, %v1472
        %v1474 = vpop.f32.mrb[0].mxu0
        %1475 = vmatprep.mubr.bf16.mxu0 0
        %1476 = vmatmul.mubr.bf16.gmra.mrb[0].mxu0 %v984
        %v1477 = vpop.f32.mrb[0].mxu0
        %v1478 = vadd.f32 0.0, %v1477
        %v1479 = vpop.f32.mrb[0].mxu0
        %v1480 = vpop.f32.mrb[0].mxu0
        %v1481 = vadd.f32 0.0, %v1480
        %v1482 = vpop.f32.mrb[0].mxu0
        %1483 = vmatprep.mubr.bf16.mxu0 0
        %1484 = vmatmul.mubr.bf16.gmra.mrb[0].mxu0 %v986
        %v1485 = vpop.f32.mrb[0].mxu0
        %v1486 = vadd.f32 0.0, %v1485
        %v1487 = vpop.f32.mrb[0].mxu0
        %v1488 = vpop.f32.mrb[0].mxu0
        %v1489 = vadd.f32 0.0, %v1488
        %v1490 = vpop.f32.mrb[0].mxu0
        %1491 = vmatprep.mubr.bf16.mxu0 0
        %1492 = vmatmul.mubr.bf16.gmra.mrb[0].mxu0 %v988
        %v1493 = vpop.f32.mrb[0].mxu0
        %v1494 = vadd.f32 0.0, %v1493
        %v1495 = vpop.f32.mrb[0].mxu0
        %v1496 = vpop.f32.mrb[0].mxu0
        %v1497 = vadd.f32 0.0, %v1496
        %v1498 = vpop.f32.mrb[0].mxu0
        %1499 = vmatprep.mubr.bf16.mxu0 0
        %1500 = vmatmul.mubr.bf16.gmra.mrb[0].mxu0 %v990
        %v1501 = vpop.f32.mrb[0].mxu0
        %v1502 = vadd.f32 0.0, %v1501
        %v1503 = vpop.f32.mrb[0].mxu0
        %v1504 = vpop.f32.mrb[0].mxu0
        %v1505 = vadd.f32 0.0, %v1504
        %v1506 = vpop.f32.mrb[0].mxu0
        %1507 = vmatprep.mubr.bf16.mxu0 0
        %1508 = vmatmul.mubr.bf16.gmra.mrb[0].mxu0 %v992
        %v1509 = vpop.f32.mrb[0].mxu0
        %v1510 = vadd.f32 0.0, %v1509
        %v1511 = vpop.f32.mrb[0].mxu0
        %v1512 = vpop.f32.mrb[0].mxu0
        %v1513 = vadd.f32 0.0, %v1512
        %v1514 = vpop.f32.mrb[0].mxu0
        %1515 = vmatprep.mubr.bf16.mxu0 0
        %1516 = vmatmul.mubr.bf16.gmra.mrb[0].mxu0 %v1361
        %v1517 = vpop.f32.mrb[0].mxu0
        %v1518 = vadd.f32 0.0, %v1517
        %v1519 = vpop.f32.mrb[0].mxu0
        %v1520 = vpop.f32.mrb[0].mxu0
        %v1521 = vadd.f32 0.0, %v1520
        %v1522 = vpop.f32.mrb[0].mxu0
        %1523 = vdwg.mxu0
        %v1524 = vadd.f32 %v1210, %v1398
        %v1525 = vadd.f32 %v1213, %v1401
        %v1526 = vadd.f32 %v1218, %v1406
        %v1527 = vadd.f32 %v1221, %v1409
        %v1528 = vadd.f32 %v1226, %v1414
        %v1529 = vadd.f32 %v1229, %v1417
        %v1530 = vadd.f32 %v1234, %v1422
        %v1531 = vadd.f32 %v1237, %v1425
        %v1532 = vadd.f32 %v1242, %v1430
        %v1533 = vadd.f32 %v1245, %v1433
        %v1534 = vadd.f32 %v1250, %v1438
        %v1535 = vadd.f32 %v1253, %v1441
        %v1536 = vadd.f32 %v1258, %v1446
        %v1537 = vadd.f32 %v1261, %v1449
        %v1538 = vadd.f32 %v1266, %v1454
        %v1539 = vadd.f32 %v1269, %v1457
        %v1540 = vadd.f32 %v1274, %v1462
        %v1541 = vadd.f32 %v1277, %v1465
        %v1542 = vadd.f32 %v1282, %v1470
        %v1543 = vadd.f32 %v1285, %v1473
        %v1544 = vadd.f32 %v1290, %v1478
        %v1545 = vadd.f32 %v1293, %v1481
        %v1546 = vadd.f32 %v1298, %v1486
        %v1547 = vadd.f32 %v1301, %v1489
        %v1548 = vadd.f32 %v1306, %v1494
        %v1549 = vadd.f32 %v1309, %v1497
        %v1550 = vadd.f32 %v1314, %v1502
        %v1551 = vadd.f32 %v1317, %v1505
        %v1552 = vadd.f32 %v1322, %v1510
        %v1553 = vadd.f32 %v1325, %v1513
        %v1554 = vadd.f32 %v1330, %v1518
        %v1555 = vadd.f32 %v1333, %v1521
        %v1556 = vld [vmem:[%s239] sm:$0x1]
        %v1557 = vlaneseq
        %v1558 = vshrl.u32 %v1557, 7
        %v1559 = vsub.s32 0, %v1558
        %v1560 = vrot.slane %v1556, %v1559
        %v1561 = vmul.f32 %v1524, %v1560
        %v1562 = vmul.f32 %v1525, %v1560
        %v1563 = vmul.f32 %v1526, %v1560
        %v1564 = vmul.f32 %v1527, %v1560
        %v1565 = vmul.f32 %v1528, %v1560
        %v1566 = vmul.f32 %v1529, %v1560
        %v1567 = vmul.f32 %v1530, %v1560
        %v1568 = vmul.f32 %v1531, %v1560
        %v1569 = vmul.f32 %v1532, %v1560
        %v1570 = vmul.f32 %v1533, %v1560
        %v1571 = vmul.f32 %v1534, %v1560
        %v1572 = vmul.f32 %v1535, %v1560
        %v1573 = vmul.f32 %v1536, %v1560
        %v1574 = vmul.f32 %v1537, %v1560
        %v1575 = vmul.f32 %v1538, %v1560
        %v1576 = vmul.f32 %v1539, %v1560
        %v1577 = vmul.f32 %v1540, %v1560
        %v1578 = vmul.f32 %v1541, %v1560
        %v1579 = vmul.f32 %v1542, %v1560
        %v1580 = vmul.f32 %v1543, %v1560
        %v1581 = vmul.f32 %v1544, %v1560
        %v1582 = vmul.f32 %v1545, %v1560
        %v1583 = vmul.f32 %v1546, %v1560
        %v1584 = vmul.f32 %v1547, %v1560
        %v1585 = vmul.f32 %v1548, %v1560
        %v1586 = vmul.f32 %v1549, %v1560
        %v1587 = vmul.f32 %v1550, %v1560
        %v1588 = vmul.f32 %v1551, %v1560
        %v1589 = vmul.f32 %v1552, %v1560
        %v1590 = vmul.f32 %v1553, %v1560
        %v1591 = vmul.f32 %v1554, %v1560
        %v1592 = vmul.f32 %v1555, %v1560
        %v1593 = vld [vmem:[%s239 + $0x1] sm:$0x1]
        %v1594 = vlaneseq
        %v1595 = vshrl.u32 %v1594, 7
        %v1596 = vsub.s32 0, %v1595
        %v1597 = vrot.slane %v1593, %v1596
        %v1598 = vadd.f32 %v1561, %v1597
        %v1599 = vadd.f32 %v1562, %v1597
        %v1600 = vadd.f32 %v1563, %v1597
        %v1601 = vadd.f32 %v1564, %v1597
        %v1602 = vadd.f32 %v1565, %v1597
        %v1603 = vadd.f32 %v1566, %v1597
        %v1604 = vadd.f32 %v1567, %v1597
        %v1605 = vadd.f32 %v1568, %v1597
        %v1606 = vadd.f32 %v1569, %v1597
        %v1607 = vadd.f32 %v1570, %v1597
        %v1608 = vadd.f32 %v1571, %v1597
        %v1609 = vadd.f32 %v1572, %v1597
        %v1610 = vadd.f32 %v1573, %v1597
        %v1611 = vadd.f32 %v1574, %v1597
        %v1612 = vadd.f32 %v1575, %v1597
        %v1613 = vadd.f32 %v1576, %v1597
        %v1614 = vadd.f32 %v1577, %v1597
        %v1615 = vadd.f32 %v1578, %v1597
        %v1616 = vadd.f32 %v1579, %v1597
        %v1617 = vadd.f32 %v1580, %v1597
        %v1618 = vadd.f32 %v1581, %v1597
        %v1619 = vadd.f32 %v1582, %v1597
        %v1620 = vadd.f32 %v1583, %v1597
        %v1621 = vadd.f32 %v1584, %v1597
        %v1622 = vadd.f32 %v1585, %v1597
        %v1623 = vadd.f32 %v1586, %v1597
        %v1624 = vadd.f32 %v1587, %v1597
        %v1625 = vadd.f32 %v1588, %v1597
        %v1626 = vadd.f32 %v1589, %v1597
        %v1627 = vadd.f32 %v1590, %v1597
        %v1628 = vadd.f32 %v1591, %v1597
        %v1629 = vadd.f32 %v1592, %v1597
        %v1630 = vxor.u32 %v1598, 2147483648
        %v1631 = vxor.u32 %v1599, 2147483648
        %v1632 = vxor.u32 %v1600, 2147483648
        %v1633 = vxor.u32 %v1601, 2147483648
        %v1634 = vxor.u32 %v1602, 2147483648
        %v1635 = vxor.u32 %v1603, 2147483648
        %v1636 = vxor.u32 %v1604, 2147483648
        %v1637 = vxor.u32 %v1605, 2147483648
        %v1638 = vxor.u32 %v1606, 2147483648
        %v1639 = vxor.u32 %v1607, 2147483648
        %v1640 = vxor.u32 %v1608, 2147483648
        %v1641 = vxor.u32 %v1609, 2147483648
        %v1642 = vxor.u32 %v1610, 2147483648
        %v1643 = vxor.u32 %v1611, 2147483648
        %v1644 = vxor.u32 %v1612, 2147483648
        %v1645 = vxor.u32 %v1613, 2147483648
        %v1646 = vxor.u32 %v1614, 2147483648
        %v1647 = vxor.u32 %v1615, 2147483648
        %v1648 = vxor.u32 %v1616, 2147483648
        %v1649 = vxor.u32 %v1617, 2147483648
        %v1650 = vxor.u32 %v1618, 2147483648
        %v1651 = vxor.u32 %v1619, 2147483648
        %v1652 = vxor.u32 %v1620, 2147483648
        %v1653 = vxor.u32 %v1621, 2147483648
        %v1654 = vxor.u32 %v1622, 2147483648
        %v1655 = vxor.u32 %v1623, 2147483648
        %v1656 = vxor.u32 %v1624, 2147483648
        %v1657 = vxor.u32 %v1625, 2147483648
        %v1658 = vxor.u32 %v1626, 2147483648
        %v1659 = vxor.u32 %v1627, 2147483648
        %v1660 = vxor.u32 %v1628, 2147483648
        %v1661 = vxor.u32 %v1629, 2147483648
        %v1662 = vmul.f32 %v1630, 1.442695
        %v1663 = vpow.pop %v1662
        %v1664 = vmul.f32 %v1631, 1.442695
        %v1665 = vpow.pop %v1664
        %v1666 = vmul.f32 %v1632, 1.442695
        %v1667 = vpow.pop %v1666
        %v1668 = vmul.f32 %v1633, 1.442695
        %v1669 = vpow.pop %v1668
        %v1670 = vmul.f32 %v1634, 1.442695
        %v1671 = vpow.pop %v1670
        %v1672 = vmul.f32 %v1635, 1.442695
        %v1673 = vpow.pop %v1672
        %v1674 = vmul.f32 %v1636, 1.442695
        %v1675 = vpow.pop %v1674
        %v1676 = vmul.f32 %v1637, 1.442695
        %v1677 = vpow.pop %v1676
        %v1678 = vmul.f32 %v1638, 1.442695
        %v1679 = vpow.pop %v1678
        %v1680 = vmul.f32 %v1639, 1.442695
        %v1681 = vpow.pop %v1680
        %v1682 = vmul.f32 %v1640, 1.442695
        %v1683 = vpow.pop %v1682
        %v1684 = vmul.f32 %v1641, 1.442695
        %v1685 = vpow.pop %v1684
        %v1686 = vmul.f32 %v1642, 1.442695
        %v1687 = vpow.pop %v1686
        %v1688 = vmul.f32 %v1643, 1.442695
        %v1689 = vpow.pop %v1688
        %v1690 = vmul.f32 %v1644, 1.442695
        %v1691 = vpow.pop %v1690
        %v1692 = vmul.f32 %v1645, 1.442695
        %v1693 = vpow.pop %v1692
        %v1694 = vmul.f32 %v1646, 1.442695
        %v1695 = vpow.pop %v1694
        %v1696 = vmul.f32 %v1647, 1.442695
        %v1697 = vpow.pop %v1696
        %v1698 = vmul.f32 %v1648, 1.442695
        %v1699 = vpow.pop %v1698
        %v1700 = vmul.f32 %v1649, 1.442695
        %v1701 = vpow.pop %v1700
        %v1702 = vmul.f32 %v1650, 1.442695
        %v1703 = vpow.pop %v1702
        %v1704 = vmul.f32 %v1651, 1.442695
        %v1705 = vpow.pop %v1704
        %v1706 = vmul.f32 %v1652, 1.442695
        %v1707 = vpow.pop %v1706
        %v1708 = vmul.f32 %v1653, 1.442695
        %v1709 = vpow.pop %v1708
        %v1710 = vmul.f32 %v1654, 1.442695
        %v1711 = vpow.pop %v1710
        %v1712 = vmul.f32 %v1655, 1.442695
        %v1713 = vpow.pop %v1712
        %v1714 = vmul.f32 %v1656, 1.442695
        %v1715 = vpow.pop %v1714
        %v1716 = vmul.f32 %v1657, 1.442695
        %v1717 = vpow.pop %v1716
        %v1718 = vmul.f32 %v1658, 1.442695
        %v1719 = vpow.pop %v1718
        %v1720 = vmul.f32 %v1659, 1.442695
        %v1721 = vpow.pop %v1720
        %v1722 = vmul.f32 %v1660, 1.442695
        %v1723 = vpow.pop %v1722
        %v1724 = vmul.f32 %v1661, 1.442695
        %v1725 = vpow.pop %v1724
        %v1726 = vadd.f32 %v1663, 1.0
        %v1727 = vadd.f32 %v1665, 1.0
        %v1728 = vadd.f32 %v1667, 1.0
        %v1729 = vadd.f32 %v1669, 1.0
        %v1730 = vadd.f32 %v1671, 1.0
        %v1731 = vadd.f32 %v1673, 1.0
        %v1732 = vadd.f32 %v1675, 1.0
        %v1733 = vadd.f32 %v1677, 1.0
        %v1734 = vadd.f32 %v1679, 1.0
        %v1735 = vadd.f32 %v1681, 1.0
        %v1736 = vadd.f32 %v1683, 1.0
        %v1737 = vadd.f32 %v1685, 1.0
        %v1738 = vadd.f32 %v1687, 1.0
        %v1739 = vadd.f32 %v1689, 1.0
        %v1740 = vadd.f32 %v1691, 1.0
        %v1741 = vadd.f32 %v1693, 1.0
        %v1742 = vadd.f32 %v1695, 1.0
        %v1743 = vadd.f32 %v1697, 1.0
        %v1744 = vadd.f32 %v1699, 1.0
        %v1745 = vadd.f32 %v1701, 1.0
        %v1746 = vadd.f32 %v1703, 1.0
        %v1747 = vadd.f32 %v1705, 1.0
        %v1748 = vadd.f32 %v1707, 1.0
        %v1749 = vadd.f32 %v1709, 1.0
        %v1750 = vadd.f32 %v1711, 1.0
        %v1751 = vadd.f32 %v1713, 1.0
        %v1752 = vadd.f32 %v1715, 1.0
        %v1753 = vadd.f32 %v1717, 1.0
        %v1754 = vadd.f32 %v1719, 1.0
        %v1755 = vadd.f32 %v1721, 1.0
        %v1756 = vadd.f32 %v1723, 1.0
        %v1757 = vadd.f32 %v1725, 1.0
        %v1758 = vrcp.pop %v1726
        %v1759 = vmul.f32 1.0, %v1758
        %v1760 = vrcp.pop %v1727
        %v1761 = vmul.f32 1.0, %v1760
        %v1762 = vrcp.pop %v1728
        %v1763 = vmul.f32 1.0, %v1762
        %v1764 = vrcp.pop %v1729
        %v1765 = vmul.f32 1.0, %v1764
        %v1766 = vrcp.pop %v1730
        %v1767 = vmul.f32 1.0, %v1766
        %v1768 = vrcp.pop %v1731
        %v1769 = vmul.f32 1.0, %v1768
        %v1770 = vrcp.pop %v1732
        %v1771 = vmul.f32 1.0, %v1770
        %v1772 = vrcp.pop %v1733
        %v1773 = vmul.f32 1.0, %v1772
        %v1774 = vrcp.pop %v1734
        %v1775 = vmul.f32 1.0, %v1774
        %v1776 = vrcp.pop %v1735
        %v1777 = vmul.f32 1.0, %v1776
        %v1778 = vrcp.pop %v1736
        %v1779 = vmul.f32 1.0, %v1778
        %v1780 = vrcp.pop %v1737
        %v1781 = vmul.f32 1.0, %v1780
        %v1782 = vrcp.pop %v1738
        %v1783 = vmul.f32 1.0, %v1782
        %v1784 = vrcp.pop %v1739
        %v1785 = vmul.f32 1.0, %v1784
        %v1786 = vrcp.pop %v1740
        %v1787 = vmul.f32 1.0, %v1786
        %v1788 = vrcp.pop %v1741
        %v1789 = vmul.f32 1.0, %v1788
        %v1790 = vrcp.pop %v1742
        %v1791 = vmul.f32 1.0, %v1790
        %v1792 = vrcp.pop %v1743
        %v1793 = vmul.f32 1.0, %v1792
        %v1794 = vrcp.pop %v1744
        %v1795 = vmul.f32 1.0, %v1794
        %v1796 = vrcp.pop %v1745
        %v1797 = vmul.f32 1.0, %v1796
        %v1798 = vrcp.pop %v1746
        %v1799 = vmul.f32 1.0, %v1798
        %v1800 = vrcp.pop %v1747
        %v1801 = vmul.f32 1.0, %v1800
        %v1802 = vrcp.pop %v1748
        %v1803 = vmul.f32 1.0, %v1802
        %v1804 = vrcp.pop %v1749
        %v1805 = vmul.f32 1.0, %v1804
        %v1806 = vrcp.pop %v1750
        %v1807 = vmul.f32 1.0, %v1806
        %v1808 = vrcp.pop %v1751
        %v1809 = vmul.f32 1.0, %v1808
        %v1810 = vrcp.pop %v1752
        %v1811 = vmul.f32 1.0, %v1810
        %v1812 = vrcp.pop %v1753
        %v1813 = vmul.f32 1.0, %v1812
        %v1814 = vrcp.pop %v1754
        %v1815 = vmul.f32 1.0, %v1814
        %v1816 = vrcp.pop %v1755
        %v1817 = vmul.f32 1.0, %v1816
        %v1818 = vrcp.pop %v1756
        %v1819 = vmul.f32 1.0, %v1818
        %v1820 = vrcp.pop %v1757
        %v1821 = vmul.f32 1.0, %v1820
        %v1822 = vmul.f32 %v1598, %v1759
        %v1823 = vmul.f32 %v1599, %v1761
        %v1824 = vmul.f32 %v1600, %v1763
        %v1825 = vmul.f32 %v1601, %v1765
        %v1826 = vmul.f32 %v1602, %v1767
        %v1827 = vmul.f32 %v1603, %v1769
        %v1828 = vmul.f32 %v1604, %v1771
        %v1829 = vmul.f32 %v1605, %v1773
        %v1830 = vmul.f32 %v1606, %v1775
        %v1831 = vmul.f32 %v1607, %v1777
        %v1832 = vmul.f32 %v1608, %v1779
        %v1833 = vmul.f32 %v1609, %v1781
        %v1834 = vmul.f32 %v1610, %v1783
        %v1835 = vmul.f32 %v1611, %v1785
        %v1836 = vmul.f32 %v1612, %v1787
        %v1837 = vmul.f32 %v1613, %v1789
        %v1838 = vmul.f32 %v1614, %v1791
        %v1839 = vmul.f32 %v1615, %v1793
        %v1840 = vmul.f32 %v1616, %v1795
        %v1841 = vmul.f32 %v1617, %v1797
        %v1842 = vmul.f32 %v1618, %v1799
        %v1843 = vmul.f32 %v1619, %v1801
        %v1844 = vmul.f32 %v1620, %v1803
        %v1845 = vmul.f32 %v1621, %v1805
        %v1846 = vmul.f32 %v1622, %v1807
        %v1847 = vmul.f32 %v1623, %v1809
        %v1848 = vmul.f32 %v1624, %v1811
        %v1849 = vmul.f32 %v1625, %v1813
        %v1850 = vmul.f32 %v1626, %v1815
        %v1851 = vmul.f32 %v1627, %v1817
        %v1852 = vmul.f32 %v1628, %v1819
        %v1853 = vmul.f32 %v1629, %v1821
        %v1854 = vpack.c.bf16 %v1823, %v1822
        %v1855 = vpack.c.bf16 %v1825, %v1824
        %v1856 = vpack.c.bf16 %v1827, %v1826
        %v1857 = vpack.c.bf16 %v1829, %v1828
        %v1858 = vpack.c.bf16 %v1831, %v1830
        %v1859 = vpack.c.bf16 %v1833, %v1832
        %v1860 = vpack.c.bf16 %v1835, %v1834
        %v1861 = vpack.c.bf16 %v1837, %v1836
        %v1862 = vpack.c.bf16 %v1839, %v1838
        %v1863 = vpack.c.bf16 %v1841, %v1840
        %v1864 = vpack.c.bf16 %v1843, %v1842
        %v1865 = vpack.c.bf16 %v1845, %v1844
        %v1866 = vpack.c.bf16 %v1847, %v1846
        %v1867 = vpack.c.bf16 %v1849, %v1848
        %v1868 = vpack.c.bf16 %v1851, %v1850
        %v1869 = vpack.c.bf16 %v1853, %v1852
        %v1886 = vunpack.c.l.b16 %v1854
        %v1887 = vunpack.c.h.b16 %v1854
        %v1888 = vunpack.c.l.b16 %v1855
        %v1889 = vunpack.c.h.b16 %v1855
        %v1890 = vunpack.c.l.b16 %v1856
        %v1891 = vunpack.c.h.b16 %v1856
        %v1892 = vunpack.c.l.b16 %v1857
        %v1893 = vunpack.c.h.b16 %v1857
        %v1894 = vunpack.c.l.b16 %v1858
        %v1895 = vunpack.c.h.b16 %v1858
        %v1896 = vunpack.c.l.b16 %v1859
        %v1897 = vunpack.c.h.b16 %v1859
        %v1898 = vunpack.c.l.b16 %v1860
        %v1899 = vunpack.c.h.b16 %v1860
        %v1900 = vunpack.c.l.b16 %v1861
        %v1901 = vunpack.c.h.b16 %v1861
        %v1902 = vunpack.c.l.b16 %v1862
        %v1903 = vunpack.c.h.b16 %v1862
        %v1904 = vunpack.c.l.b16 %v1863
        %v1905 = vunpack.c.h.b16 %v1863
        %v1906 = vunpack.c.l.b16 %v1864
        %v1907 = vunpack.c.h.b16 %v1864
        %v1908 = vunpack.c.l.b16 %v1865
        %v1909 = vunpack.c.h.b16 %v1865
        %v1910 = vunpack.c.l.b16 %v1866
        %v1911 = vunpack.c.h.b16 %v1866
        %v1912 = vunpack.c.l.b16 %v1867
        %v1913 = vunpack.c.h.b16 %v1867
        %v1914 = vunpack.c.l.b16 %v1868
        %v1915 = vunpack.c.h.b16 %v1868
        %v1916 = vunpack.c.l.b16 %v1869
        %v1917 = vunpack.c.h.b16 %v1869
        %v1918 = vpack.c.b16 %v1886, %v1886
        %v1919 = vpack.c.b16 %v1887, %v1887
        %v1920 = vpack.c.b16 %v1888, %v1888
        %v1921 = vpack.c.b16 %v1889, %v1889
        %v1922 = vpack.c.b16 %v1890, %v1890
        %v1923 = vpack.c.b16 %v1891, %v1891
        %v1924 = vpack.c.b16 %v1892, %v1892
        %v1925 = vpack.c.b16 %v1893, %v1893
        %v1926 = vpack.c.b16 %v1894, %v1894
        %v1927 = vpack.c.b16 %v1895, %v1895
        %v1928 = vpack.c.b16 %v1896, %v1896
        %v1929 = vpack.c.b16 %v1897, %v1897
        %v1930 = vpack.c.b16 %v1898, %v1898
        %v1931 = vpack.c.b16 %v1899, %v1899
        %v1932 = vpack.c.b16 %v1900, %v1900
        %v1933 = vpack.c.b16 %v1901, %v1901
        %v1934 = vpack.c.b16 %v1902, %v1902
        %v1935 = vpack.c.b16 %v1903, %v1903
        %v1936 = vpack.c.b16 %v1904, %v1904
        %v1937 = vpack.c.b16 %v1905, %v1905
        %v1938 = vpack.c.b16 %v1906, %v1906
        %v1939 = vpack.c.b16 %v1907, %v1907
        %v1940 = vpack.c.b16 %v1908, %v1908
        %v1941 = vpack.c.b16 %v1909, %v1909
        %v1942 = vpack.c.b16 %v1910, %v1910
        %v1943 = vpack.c.b16 %v1911, %v1911
        %v1944 = vpack.c.b16 %v1912, %v1912
        %v1945 = vpack.c.b16 %v1913, %v1913
        %v1946 = vpack.c.b16 %v1914, %v1914
        %v1947 = vpack.c.b16 %v1915, %v1915
        %v1948 = vpack.c.b16 %v1916, %v1916
        %v1949 = vpack.c.b16 %v1917, %v1917
        %1982 = vst [vmem:[%s222] sm:$0xf] %v1918
        %1983 = vst [vmem:[%s222 + $0x4] sm:$0xf] %v1919
        %1984 = vst [vmem:[%s222 + $0x8] sm:$0xf] %v1920
        %1985 = vst [vmem:[%s222 + $0xc] sm:$0xf] %v1921
        %1986 = vst [vmem:[%s222 + $0x10] sm:$0xf] %v1922
        %1987 = vst [vmem:[%s222 + $0x14] sm:$0xf] %v1923
        %1988 = vst [vmem:[%s222 + $0x18] sm:$0xf] %v1924
        %1989 = vst [vmem:[%s222 + $0x1c] sm:$0xf] %v1925
        %1990 = vst [vmem:[%s222 + $0x20] sm:$0xf] %v1926
        %1991 = vst [vmem:[%s222 + $0x24] sm:$0xf] %v1927
        %1992 = vst [vmem:[%s222 + $0x28] sm:$0xf] %v1928
        %1993 = vst [vmem:[%s222 + $0x2c] sm:$0xf] %v1929
        %1994 = vst [vmem:[%s222 + $0x30] sm:$0xf] %v1930
        %1995 = vst [vmem:[%s222 + $0x34] sm:$0xf] %v1931
        %1996 = vst [vmem:[%s222 + $0x38] sm:$0xf] %v1932
        %1997 = vst [vmem:[%s222 + $0x3c] sm:$0xf] %v1933
        %1998 = vst [vmem:[%s222 + $0x40] sm:$0xf] %v1934
        %1999 = vst [vmem:[%s222 + $0x44] sm:$0xf] %v1935
        %2000 = vst [vmem:[%s222 + $0x48] sm:$0xf] %v1936
        %2001 = vst [vmem:[%s222 + $0x4c] sm:$0xf] %v1937
        %2002 = vst [vmem:[%s222 + $0x50] sm:$0xf] %v1938
        %2003 = vst [vmem:[%s222 + $0x54] sm:$0xf] %v1939
        %2004 = vst [vmem:[%s222 + $0x58] sm:$0xf] %v1940
        %2005 = vst [vmem:[%s222 + $0x5c] sm:$0xf] %v1941
        %2006 = vst [vmem:[%s222 + $0x60] sm:$0xf] %v1942
        %2007 = vst [vmem:[%s222 + $0x64] sm:$0xf] %v1943
        %2008 = vst [vmem:[%s222 + $0x68] sm:$0xf] %v1944
        %2009 = vst [vmem:[%s222 + $0x6c] sm:$0xf] %v1945
        %2010 = vst [vmem:[%s222 + $0x70] sm:$0xf] %v1946
        %2011 = vst [vmem:[%s222 + $0x74] sm:$0xf] %v1947
        %2012 = vst [vmem:[%s222 + $0x78] sm:$0xf] %v1948
        %2013 = vst [vmem:[%s222 + $0x7c] sm:$0xf] %v1949
        %s2014 = sand.u32 %s128, 1
        %s2015 = scalar_lea.sflag [#allocation3], %s2014
        %s2016 = sand.u32 %s128, 1
        %s2017 = smul.addr %s2016, 128
        %s2018 = scalar_lea.vmem [#allocation2], %s2017
        // Predicated region
        $region33: #{tpu_custom_call.1} parent=31 // pred_check
          %p2019 = pneg %p138
        $region34: #{tpu_custom_call.1} parent=31 // pred_check_branch
          %2021 = sbr.rel (%p2019) target = $region36
        $region35: #{tpu_custom_call.1} parent=31 // pred_region
          %s2022 = smul.u32 16, %s24
          %s2024 = ssub.s32 2048, 2048
          %2025 = vsyncadd %s2015, %s2024
          %s2026 = smul.addr %s2022, 2
          %s2027 = sadd.s32 %s22, %s2026
          %s2028 = smul.addr %s23, 32
          %s2029 = sadd.s32 %s2027, %s2028
          %s2030 = smul.addr %s2029, 64
          %s2031 = scalar_lea.hbm %s3, %s2030
          %s2032 = sshll.u32 %s2018, 4
          %s2033 = int_to_ptr.vmem [resolvable:$true] %s2032
          %2038 = dma.vmem_to_hbm [thread:$0]  %s2033, 2048, %s2031, %s2015, 64, 64, 4
        $region36: #{tpu_custom_call.1} parent=31 // pred_fallthru
          _
      $region32: #{tpu_custom_call.1} parent=5 // pred_fallthru
        _
      %p2039 = scmp.le.s32.totalorder 2, %s12
      // Predicated region
      $region37: #{tpu_custom_call.1} parent=5 // pred_check
        %p2040 = pneg %p2039
      $region38: #{tpu_custom_call.1} parent=5 // pred_check_branch
        %2042 = sbr.rel (%p2040) target = $region40
      $region39: #{tpu_custom_call.1} parent=5 // pred_region
        %s2043 = ssub.s32 %s12, 2
        // Predicated region
        $region41: #{tpu_custom_call.1} parent=39 // pred_check
          %p2044 = pneg %p144
        $region42: #{tpu_custom_call.1} parent=39 // pred_check_branch
          %2046 = sbr.rel (%p2044) target = $region44
        $region43: #{tpu_custom_call.1} parent=39 // pred_region
          %s2047 = sand.u32 %s129, 1
          %s2048 = scalar_lea.sflag [#allocation3], %s2047
          %s2049 = sand.u32 %s129, 1
          %s2050 = smul.addr %s2049, 128
          %s2051 = scalar_lea.vmem [#allocation2], %s2050
          %2052 = dma.done %s2048, 2048
        $region44: #{tpu_custom_call.1} parent=39 // pred_fallthru
          _
      $region40: #{tpu_custom_call.1} parent=5 // pred_fallthru
        _
    $region6: #{tpu_custom_call.1} parent=1 // loop_footer
      %s16 = sadd.s32 1, %s12
    $region7: #{tpu_custom_call.1} parent=1 // loop_footer_branch
      %11 = sbr.rel target = $region3
    $region8: #{tpu_custom_call.1} parent=1 // loop_exit
      _
    %2053 = vsyncpa [#allocation3], 1
    %s2054 = scalar_lea.sflag [#allocation3], 1
    %2055 = vsyncpa %s2054, 1

</llo_original>
